<compile_context>
chip_gen: v7x
topology: tpu7x:2x2x1
jax: 0.10.0
libtpu: 0.0.40
codegen_flags: <defaults>
</compile_context>

<pallas_src>
import functools
import math

import jax
import jax.numpy as jnp
from jax import lax
from jax.experimental import pallas as pl
from jax.experimental.pallas import tpu as pltpu

F32 = jnp.float32
VMEM = pltpu.MemorySpace.VMEM
LANE = 128  # head output padded to a lane-dense width (multiple of 128)


def _layernorm(h, g, b, eps=1e-5):
    mu = jnp.mean(h, axis=-1, keepdims=True)
    var = jnp.mean((h - mu) ** 2, axis=-1, keepdims=True)
    return (h - mu) * lax.rsqrt(var + eps) * g + b


# ----------------------------------------------------------------------------
# Fused SGFormer forward kernel (single grid point, everything in VMEM).
# ----------------------------------------------------------------------------
def sgformer_kernel(
    # data
    x_ref, src_ref, dst_ref, et_ref,
    # fused input projection (fc0 | lin0)
    proj_w_ref, proj_b_ref,
    # transformer branch
    ln0_g_ref, ln0_b_ref,
    wqkv_ref, bqkv_ref, ln1_g_ref, ln1_b_ref,
    # gnn branch
    bn0_s_ref, bn0_t_ref,
    gcn_w_ref, gcn_b_ref,
    lin1_w_ref, lin1_b_ref, bn1_s_ref, bn1_t_ref,
    # head
    fc_w1_ref, fc_w2_ref, fc_b_ref,
    # output
    o_ref,
    *, alpha, hid):
    x = x_ref[...]
    n = x.shape[0]
    n_f = float(n)

    # --- shared input projection: fc0 (trans) | lin0 (gnn) in one MXU pass ---
    xp = jnp.dot(x, proj_w_ref[...], preferred_element_type=F32) + proj_b_ref[...]

    # ---------------- transformer branch ----------------
    h = _layernorm(xp[:, :hid], ln0_g_ref[...], ln0_b_ref[...])
    h = jnp.maximum(h, 0.0)                           # layer_[0]; dropout = identity (eval)

    # fused q|k|v projection: one wide MXU pass, then static lane slices
    qkv = jnp.dot(h, wqkv_ref[...], preferred_element_type=F32) + bqkv_ref[...]
    q = qkv[:, :hid]
    k = qkv[:, hid:2 * hid]
    v = qkv[:, 2 * hid:3 * hid]

    def inv_frob(a):                                  # 1 / ||a||_F  as [1,1]
        s = jnp.sum(jnp.sum(a * a, axis=-1, keepdims=True), axis=0, keepdims=True)
        return lax.rsqrt(s)

    qn = q * inv_frob(q)                              # qs / ||qs||_F
    kn = k * inv_frob(k)                              # ks / ||ks||_F

    # kvs = kn^T @ v : contract over axis 0 without materializing a transpose
    kvs = lax.dot_general(kn, v, (((0,), (0,)), ((), ())),
                          preferred_element_type=F32)                    # [M, D]
    num = jnp.dot(qn, kvs, preferred_element_type=F32) + n_f * v         # [N, D]
    ks_sum = jnp.sum(kn, axis=0, keepdims=True)                          # [1, M]
    normalizer = jnp.sum(qn * ks_sum, axis=-1, keepdims=True) + n_f      # [N, 1]
    attn = num / normalizer        # exact divide: normalizer can approach zero

    xt = alpha * attn + (1.0 - alpha) * h             # residual (head-mean = identity)
    xt = _layernorm(xt, ln1_g_ref[...], ln1_b_ref[...])
    x_trans = jnp.maximum(xt, 0.0)

    # ---------------- gnn branch ----------------
    g = xp[:, hid:] * bn0_s_ref[...] + bn0_t_ref[...]  # BatchNorm1d (eval, folded)
    g = jnp.maximum(g, 0.0)

    # Edge gather/scatter operators built on-chip (no dense NxN adjacency).
    e = src_ref.shape[0]
    s_oh = (lax.broadcasted_iota(jnp.int32, (e, n), 1)
            == src_ref[...]).astype(F32)              # [E, N]  gather from source
    d_oh_t = (lax.broadcasted_iota(jnp.int32, (n, e), 0)
              == dst_ref[...]).astype(F32)            # [N, E]  scatter to target
    t_oh = (lax.broadcasted_iota(jnp.int32, (e, 2), 1)
            == et_ref[...]).astype(F32)               # [E, 2]  edge-type one-hot

    # per-type in-degree incl. self loop, then D^{-1/2}
    deg = jnp.dot(d_oh_t, t_oh, preferred_element_type=F32) + 1.0        # [N, 2]
    dinv = lax.rsqrt(deg)                                                # [N, 2]

    # lane-wise expansion of per-type [.,2] columns to a [., 2H] slab
    hi_n = (lax.broadcasted_iota(jnp.int32, (n, 2 * hid), 1) >= hid).astype(F32)
    dinv_rep = dinv[:, 0:1] * (1.0 - hi_n) + dinv[:, 1:2] * hi_n         # [N, 2H]

    # fused GCN feature transform for both edge types (one wide MXU pass)
    xw = jnp.dot(g, gcn_w_ref[...], preferred_element_type=F32)          # [N, 2H]
    gath_x = jnp.dot(s_oh, xw, preferred_element_type=F32)               # [E, 2H]
    gath_d = jnp.dot(s_oh, dinv, preferred_element_type=F32)             # [E, 2]

    # per-edge scaling (type mask * dinv[src]) expanded lane-wise, one scatter
    sc = t_oh * gath_d                                                   # [E, 2]
    hi_e = (lax.broadcasted_iota(jnp.int32, (e, 2 * hid), 1) >= hid).astype(F32)
    scale = sc[:, 0:1] * (1.0 - hi_e) + sc[:, 1:2] * hi_e                # [E, 2H]
    agg = jnp.dot(d_oh_t, scale * gath_x, preferred_element_type=F32)    # [N, 2H]

    # dinv * (A_t @ (dinv * xW) + self-loop) + bias, for both types at once
    gout = dinv_rep * agg + (dinv_rep * dinv_rep) * xw + gcn_b_ref[...]  # [N, 2H]
    h_gcn = gout[:, :hid] + gout[:, hid:]             # HeteroConv aggr='sum'

    h2 = jnp.dot(h_gcn, lin1_w_ref[...], preferred_element_type=F32) + lin1_b_ref[...]
    h2 = h2 + g                                       # residual
    h2 = h2 * bn1_s_ref[...] + bn1_t_ref[...]         # BatchNorm1d (eval, folded)
    x_graph = jnp.maximum(h2, 0.0)

    # ---------------- head: concat -> Linear -> Tanh (lane-dense padded out) --
    out = (jnp.dot(x_trans, fc_w1_ref[...], preferred_element_type=F32)
           + jnp.dot(x_graph, fc_w2_ref[...], preferred_element_type=F32)
           + fc_b_ref[...])
    o_ref[...] = jnp.tanh(out)


# ----------------------------------------------------------------------------
# Parameters (weights stored [in, out]; biases / norm params as [1, F] rows)
# ----------------------------------------------------------------------------
def _linear_params(key, fan_in, fan_out):
    kw, kb = jax.random.split(key)
    bound = 1.0 / math.sqrt(fan_in)
    w = jax.random.uniform(kw, (fan_in, fan_out), F32, -bound, bound)
    b = jax.random.uniform(kb, (1, fan_out), F32, -bound, bound)
    return w, b


def _fold_bn(g, b, rm, rv, eps=1e-5):
    s = g * lax.rsqrt(rv + eps)
    return s, b - rm * s


def init_params(key, in_dim, hid, out_dim, out_pad=LANE):
    ks = jax.random.split(key, 9)
    p = {}
    ones = jnp.ones((1, hid), F32)
    zeros = jnp.zeros((1, hid), F32)
    # --- fused input projection: fc0 (trans) | lin0 (gnn) ---
    fc0_w, fc0_b = _linear_params(ks[0], in_dim, hid)
    lin0_w, lin0_b = _linear_params(ks[4], in_dim, hid)
    p["proj_w"] = jnp.concatenate([fc0_w, lin0_w], axis=1)     # [in, 2H]
    p["proj_b"] = jnp.concatenate([fc0_b, lin0_b], axis=1)     # [1, 2H]
    # --- TransConv branch ---
    p["ln0_g"], p["ln0_b"] = ones, zeros
    wq, bq = _linear_params(ks[1], hid, hid)
    wk, bk = _linear_params(ks[2], hid, hid)
    wv, bv = _linear_params(ks[3], hid, hid)
    p["wqkv"] = jnp.concatenate([wq, wk, wv], axis=1)          # [H, 3H]
    p["bqkv"] = jnp.concatenate([bq, bk, bv], axis=1)          # [1, 3H]
    p["ln1_g"], p["ln1_b"] = ones, zeros
    # --- GNN branch ---
    p["bn0_s"], p["bn0_t"] = _fold_bn(ones, zeros, zeros, ones)
    gcn0_w, _ = _linear_params(ks[5], hid, hid)
    gcn1_w, _ = _linear_params(ks[6], hid, hid)
    p["gcn_w"] = jnp.concatenate([gcn0_w, gcn1_w], axis=1)     # [H, 2H]
    p["gcn_b"] = jnp.zeros((1, 2 * hid), F32)                  # PyG GCNConv bias init
    p["lin1_w"], p["lin1_b"] = _linear_params(ks[7], hid, hid)
    p["bn1_s"], p["bn1_t"] = _fold_bn(ones, zeros, zeros, ones)
    # --- head (columns zero-padded to a lane-dense output width) ---
    fcw, fcb = _linear_params(ks[8], 2 * hid, out_dim)
    pad = out_pad - out_dim
    p["fc_w1"] = jnp.pad(fcw[:hid], ((0, 0), (0, pad)))
    p["fc_w2"] = jnp.pad(fcw[hid:], ((0, 0), (0, pad)))
    p["fc_b"] = jnp.pad(fcb, ((0, 0), (0, pad)))
    return p


# ----------------------------------------------------------------------------
# Forward: one fused pallas_call
# ----------------------------------------------------------------------------
def sgformer_forward(params, x, edge_index, edge_type, hid, out_dim,
                     alpha=0.5, out_pad=LANE):
    p = params
    n, in_dim = x.shape
    e = edge_index.shape[1]
    src = edge_index[0].astype(jnp.int32).reshape(e, 1)   # column  -> gather op
    dst = edge_index[1].astype(jnp.int32).reshape(1, e)   # row     -> scatter op
    et = edge_type.astype(jnp.int32).reshape(e, 1)

    args = (x, src, dst, et,
            p["proj_w"], p["proj_b"],
            p["ln0_g"], p["ln0_b"],
            p["wqkv"], p["bqkv"], p["ln1_g"], p["ln1_b"],
            p["bn0_s"], p["bn0_t"],
            p["gcn_w"], p["gcn_b"],
            p["lin1_w"], p["lin1_b"], p["bn1_s"], p["bn1_t"],
            p["fc_w1"], p["fc_w2"], p["fc_b"])

    flops = 2 * (n * in_dim * 2 * hid        # fused fc0|lin0
                 + n * hid * 3 * hid         # fused qkv
                 + 2 * n * hid * hid         # kvs + qn @ kvs
                 + n * hid * 2 * hid         # fused gcn transform
                 + e * n * (2 * hid + 4)     # gather (x, dinv) + deg
                 + e * n * 2 * hid           # fused scatter (both types)
                 + n * hid * hid             # lin1
                 + n * 2 * hid * out_pad)    # head
    transcendentals = n * out_pad + 8 * n
    bytes_accessed = (sum(int(a.size) * a.dtype.itemsize for a in args)
                      + n * out_pad * 4)

    out = pl.pallas_call(
        functools.partial(sgformer_kernel, alpha=alpha, hid=hid),
        out_shape=jax.ShapeDtypeStruct((n, out_pad), F32),
        in_specs=[pl.BlockSpec(memory_space=VMEM) for _ in args],
        out_specs=pl.BlockSpec(memory_space=VMEM),
        compiler_params=pltpu.CompilerParams(vmem_limit_bytes=32 * 1024 * 1024),
        cost_estimate=pl.CostEstimate(flops=int(flops),
                                      transcendentals=int(transcendentals),
                                      bytes_accessed=int(bytes_accessed)),
    )(*args)
    return out[:, :out_dim]


if __name__ == "__main__":
    N, IN, HID, OUT, E = 16, 8, 32, 4, 48

    key = jax.random.PRNGKey(0)
    k_x, k_src, k_dst, k_typ, k_par = jax.random.split(key, 5)

    x = jax.random.normal(k_x, (N, IN), F32)
    src = jax.random.randint(k_src, (E,), 0, N)
    dst = jax.random.randint(k_dst, (E,), 0, N)
    edge_index = jnp.stack([src, dst])          # [2, E]
    edge_type = jax.random.randint(k_typ, (E,), 0, 2)

    params = init_params(k_par, IN, HID, OUT, LANE)

    out = sgformer_forward(params, x, edge_index, edge_type, HID, OUT, alpha=0.5)
    jax.block_until_ready(out)
    assert out.shape == (N, OUT) and out.dtype == F32
    print("KERNEL_OK")
</pallas_src>

<mosaic_0001>
module attributes {stable_mosaic.version = 11 : i64} {
  func.func @sgformer_kernel(%arg0: memref<16x8xf32, #tpu.memory_space<vmem>>, %arg1: memref<48x1xi32, #tpu.memory_space<vmem>>, %arg2: memref<1x48xi32, #tpu.memory_space<vmem>>, %arg3: memref<48x1xi32, #tpu.memory_space<vmem>>, %arg4: memref<8x64xf32, #tpu.memory_space<vmem>>, %arg5: memref<1x64xf32, #tpu.memory_space<vmem>>, %arg6: memref<1x32xf32, #tpu.memory_space<vmem>>, %arg7: memref<1x32xf32, #tpu.memory_space<vmem>>, %arg8: memref<32x96xf32, #tpu.memory_space<vmem>>, %arg9: memref<1x96xf32, #tpu.memory_space<vmem>>, %arg10: memref<1x32xf32, #tpu.memory_space<vmem>>, %arg11: memref<1x32xf32, #tpu.memory_space<vmem>>, %arg12: memref<1x32xf32, #tpu.memory_space<vmem>>, %arg13: memref<1x32xf32, #tpu.memory_space<vmem>>, %arg14: memref<32x64xf32, #tpu.memory_space<vmem>>, %arg15: memref<1x64xf32, #tpu.memory_space<vmem>>, %arg16: memref<32x32xf32, #tpu.memory_space<vmem>>, %arg17: memref<1x32xf32, #tpu.memory_space<vmem>>, %arg18: memref<1x32xf32, #tpu.memory_space<vmem>>, %arg19: memref<1x32xf32, #tpu.memory_space<vmem>>, %arg20: memref<32x128xf32, #tpu.memory_space<vmem>>, %arg21: memref<32x128xf32, #tpu.memory_space<vmem>>, %arg22: memref<1x128xf32, #tpu.memory_space<vmem>>, %arg23: memref<16x128xf32, #tpu.memory_space<vmem>>) attributes {dimension_semantics = [], scalar_prefetch = 0 : i64, scratch_operands = 0 : i64, tpu.core_type = #tpu.core_type<tc>} {
    %c0 = arith.constant 0 : index
    %c0_0 = arith.constant 0 : index
    %0 = vector.load %arg0[%c0, %c0_0] : memref<16x8xf32, #tpu.memory_space<vmem>>, vector<16x8xf32>
    %c0_1 = arith.constant 0 : index
    %c0_2 = arith.constant 0 : index
    %1 = vector.load %arg4[%c0_1, %c0_2] : memref<8x64xf32, #tpu.memory_space<vmem>>, vector<8x64xf32>
    %cst = arith.constant dense<0.000000e+00> : vector<16x64xf32>
    %2 = tpu.matmul %0, %1, %cst {dimension_numbers = #tpu.dot_dimension_numbers<[1], [0], [0], [1], [0, 0, 1, 1], [], []>} : vector<16x8xf32>, vector<8x64xf32>, vector<16x64xf32> -> vector<16x64xf32>
    %c0_3 = arith.constant 0 : index
    %c0_4 = arith.constant 0 : index
    %3 = vector.load %arg5[%c0_3, %c0_4] : memref<1x64xf32, #tpu.memory_space<vmem>>, vector<1x64xf32>
    %4 = vector.broadcast %3 : vector<1x64xf32> to vector<16x64xf32>
    %5 = arith.addf %2, %4 : vector<16x64xf32>
    %6 = vector.extract_strided_slice %5 {offsets = [0, 0], sizes = [16, 32], strides = [1, 1]} : vector<16x64xf32> to vector<16x32xf32>
    %c0_5 = arith.constant 0 : index
    %c0_6 = arith.constant 0 : index
    %7 = vector.load %arg6[%c0_5, %c0_6] : memref<1x32xf32, #tpu.memory_space<vmem>>, vector<1x32xf32>
    %c0_7 = arith.constant 0 : index
    %c0_8 = arith.constant 0 : index
    %8 = vector.load %arg7[%c0_7, %c0_8] : memref<1x32xf32, #tpu.memory_space<vmem>>, vector<1x32xf32>
    %cst_9 = arith.constant dense<0.000000e+00> : vector<16xf32>
    %9 = vector.multi_reduction <add>, %6, %cst_9 [1] : vector<16x32xf32> to vector<16xf32>
    %10 = vector.shape_cast %9 : vector<16xf32> to vector<16x1xf32>
    %cst_10 = arith.constant 3.200000e+01 : f32
    %11 = vector.broadcast %cst_10 : f32 to vector<16x1xf32>
    %12 = arith.divf %10, %11 : vector<16x1xf32>
    %13 = vector.broadcast %12 : vector<16x1xf32> to vector<16x32xf32>
    %14 = arith.subf %6, %13 : vector<16x32xf32>
    %15 = arith.mulf %14, %14 : vector<16x32xf32>
    %cst_11 = arith.constant dense<0.000000e+00> : vector<16xf32>
    %16 = vector.multi_reduction <add>, %15, %cst_11 [1] : vector<16x32xf32> to vector<16xf32>
    %17 = vector.shape_cast %16 : vector<16xf32> to vector<16x1xf32>
    %cst_12 = arith.constant 3.200000e+01 : f32
    %18 = vector.broadcast %cst_12 : f32 to vector<16x1xf32>
    %19 = arith.divf %17, %18 : vector<16x1xf32>
    %20 = vector.broadcast %12 : vector<16x1xf32> to vector<16x32xf32>
    %21 = arith.subf %6, %20 : vector<16x32xf32>
    %cst_13 = arith.constant 9.99999974E-6 : f32
    %22 = vector.broadcast %cst_13 : f32 to vector<16x1xf32>
    %23 = arith.addf %19, %22 : vector<16x1xf32>
    %24 = math.rsqrt %23 : vector<16x1xf32>
    %25 = vector.broadcast %24 : vector<16x1xf32> to vector<16x32xf32>
    %26 = arith.mulf %21, %25 : vector<16x32xf32>
    %27 = vector.broadcast %7 : vector<1x32xf32> to vector<16x32xf32>
    %28 = arith.mulf %26, %27 : vector<16x32xf32>
    %29 = vector.broadcast %8 : vector<1x32xf32> to vector<16x32xf32>
    %30 = arith.addf %28, %29 : vector<16x32xf32>
    %cst_14 = arith.constant 0.000000e+00 : f32
    %31 = vector.broadcast %cst_14 : f32 to vector<16x32xf32>
    %32 = arith.maximumf %30, %31 : vector<16x32xf32>
    %c0_15 = arith.constant 0 : index
    %c0_16 = arith.constant 0 : index
    %33 = vector.load %arg8[%c0_15, %c0_16] : memref<32x96xf32, #tpu.memory_space<vmem>>, vector<32x96xf32>
    %cst_17 = arith.constant dense<0.000000e+00> : vector<16x96xf32>
    %34 = tpu.matmul %32, %33, %cst_17 {dimension_numbers = #tpu.dot_dimension_numbers<[1], [0], [0], [1], [0, 0, 1, 1], [], []>} : vector<16x32xf32>, vector<32x96xf32>, vector<16x96xf32> -> vector<16x96xf32>
    %c0_18 = arith.constant 0 : index
    %c0_19 = arith.constant 0 : index
    %35 = vector.load %arg9[%c0_18, %c0_19] : memref<1x96xf32, #tpu.memory_space<vmem>>, vector<1x96xf32>
    %36 = vector.broadcast %35 : vector<1x96xf32> to vector<16x96xf32>
    %37 = arith.addf %34, %36 : vector<16x96xf32>
    %38 = vector.extract_strided_slice %37 {offsets = [0, 0], sizes = [16, 32], strides = [1, 1]} : vector<16x96xf32> to vector<16x32xf32>
    %39 = vector.extract_strided_slice %37 {offsets = [0, 32], sizes = [16, 32], strides = [1, 1]} : vector<16x96xf32> to vector<16x32xf32>
    %40 = vector.extract_strided_slice %37 {offsets = [0, 64], sizes = [16, 32], strides = [1, 1]} : vector<16x96xf32> to vector<16x32xf32>
    %41 = arith.mulf %38, %38 : vector<16x32xf32>
    %cst_20 = arith.constant dense<0.000000e+00> : vector<16xf32>
    %42 = vector.multi_reduction <add>, %41, %cst_20 [1] : vector<16x32xf32> to vector<16xf32>
    %43 = vector.shape_cast %42 : vector<16xf32> to vector<16x1xf32>
    %cst_21 = arith.constant dense<0.000000e+00> : vector<1xf32>
    %44 = vector.multi_reduction <add>, %43, %cst_21 [0] : vector<16x1xf32> to vector<1xf32>
    %45 = vector.shape_cast %44 : vector<1xf32> to vector<1x1xf32>
    %46 = math.rsqrt %45 : vector<1x1xf32>
    %47 = vector.broadcast %46 : vector<1x1xf32> to vector<16x32xf32>
    %48 = arith.mulf %38, %47 : vector<16x32xf32>
    %49 = arith.mulf %39, %39 : vector<16x32xf32>
    %cst_22 = arith.constant dense<0.000000e+00> : vector<16xf32>
    %50 = vector.multi_reduction <add>, %49, %cst_22 [1] : vector<16x32xf32> to vector<16xf32>
    %51 = vector.shape_cast %50 : vector<16xf32> to vector<16x1xf32>
    %cst_23 = arith.constant dense<0.000000e+00> : vector<1xf32>
    %52 = vector.multi_reduction <add>, %51, %cst_23 [0] : vector<16x1xf32> to vector<1xf32>
    %53 = vector.shape_cast %52 : vector<1xf32> to vector<1x1xf32>
    %54 = math.rsqrt %53 : vector<1x1xf32>
    %55 = vector.broadcast %54 : vector<1x1xf32> to vector<16x32xf32>
    %56 = arith.mulf %39, %55 : vector<16x32xf32>
    %cst_24 = arith.constant dense<0.000000e+00> : vector<32x32xf32>
    %57 = tpu.matmul %56, %40, %cst_24 {dimension_numbers = #tpu.dot_dimension_numbers<[0], [0], [1], [1], [0, 1, 1, 1], [], []>} : vector<16x32xf32>, vector<16x32xf32>, vector<32x32xf32> -> vector<32x32xf32>
    %cst_25 = arith.constant dense<0.000000e+00> : vector<16x32xf32>
    %58 = tpu.matmul %48, %57, %cst_25 {dimension_numbers = #tpu.dot_dimension_numbers<[1], [0], [0], [1], [0, 0, 1, 1], [], []>} : vector<16x32xf32>, vector<32x32xf32>, vector<16x32xf32> -> vector<16x32xf32>
    %cst_26 = arith.constant 1.600000e+01 : f32
    %59 = vector.broadcast %cst_26 : f32 to vector<16x32xf32>
    %60 = arith.mulf %59, %40 : vector<16x32xf32>
    %61 = arith.addf %58, %60 : vector<16x32xf32>
    %cst_27 = arith.constant dense<0.000000e+00> : vector<32xf32>
    %62 = vector.multi_reduction <add>, %56, %cst_27 [0] : vector<16x32xf32> to vector<32xf32>
    %63 = vector.shape_cast %62 : vector<32xf32> to vector<1x32xf32>
    %64 = vector.broadcast %63 : vector<1x32xf32> to vector<16x32xf32>
    %65 = arith.mulf %48, %64 : vector<16x32xf32>
    %cst_28 = arith.constant dense<0.000000e+00> : vector<16xf32>
    %66 = vector.multi_reduction <add>, %65, %cst_28 [1] : vector<16x32xf32> to vector<16xf32>
    %67 = vector.shape_cast %66 : vector<16xf32> to vector<16x1xf32>
    %cst_29 = arith.constant 1.600000e+01 : f32
    %68 = vector.broadcast %cst_29 : f32 to vector<16x1xf32>
    %69 = arith.addf %67, %68 : vector<16x1xf32>
    %70 = vector.broadcast %69 : vector<16x1xf32> to vector<16x32xf32>
    %71 = arith.divf %61, %70 : vector<16x32xf32>
    %cst_30 = arith.constant 5.000000e-01 : f32
    %72 = vector.broadcast %cst_30 : f32 to vector<16x32xf32>
    %73 = arith.mulf %72, %71 : vector<16x32xf32>
    %cst_31 = arith.constant 5.000000e-01 : f32
    %74 = vector.broadcast %cst_31 : f32 to vector<16x32xf32>
    %75 = arith.mulf %74, %32 : vector<16x32xf32>
    %76 = arith.addf %73, %75 : vector<16x32xf32>
    %c0_32 = arith.constant 0 : index
    %c0_33 = arith.constant 0 : index
    %77 = vector.load %arg10[%c0_32, %c0_33] : memref<1x32xf32, #tpu.memory_space<vmem>>, vector<1x32xf32>
    %c0_34 = arith.constant 0 : index
    %c0_35 = arith.constant 0 : index
    %78 = vector.load %arg11[%c0_34, %c0_35] : memref<1x32xf32, #tpu.memory_space<vmem>>, vector<1x32xf32>
    %cst_36 = arith.constant dense<0.000000e+00> : vector<16xf32>
    %79 = vector.multi_reduction <add>, %76, %cst_36 [1] : vector<16x32xf32> to vector<16xf32>
    %80 = vector.shape_cast %79 : vector<16xf32> to vector<16x1xf32>
    %cst_37 = arith.constant 3.200000e+01 : f32
    %81 = vector.broadcast %cst_37 : f32 to vector<16x1xf32>
    %82 = arith.divf %80, %81 : vector<16x1xf32>
    %83 = vector.broadcast %82 : vector<16x1xf32> to vector<16x32xf32>
    %84 = arith.subf %76, %83 : vector<16x32xf32>
    %85 = arith.mulf %84, %84 : vector<16x32xf32>
    %cst_38 = arith.constant dense<0.000000e+00> : vector<16xf32>
    %86 = vector.multi_reduction <add>, %85, %cst_38 [1] : vector<16x32xf32> to vector<16xf32>
    %87 = vector.shape_cast %86 : vector<16xf32> to vector<16x1xf32>
    %cst_39 = arith.constant 3.200000e+01 : f32
    %88 = vector.broadcast %cst_39 : f32 to vector<16x1xf32>
    %89 = arith.divf %87, %88 : vector<16x1xf32>
    %90 = vector.broadcast %82 : vector<16x1xf32> to vector<16x32xf32>
    %91 = arith.subf %76, %90 : vector<16x32xf32>
    %cst_40 = arith.constant 9.99999974E-6 : f32
    %92 = vector.broadcast %cst_40 : f32 to vector<16x1xf32>
    %93 = arith.addf %89, %92 : vector<16x1xf32>
    %94 = math.rsqrt %93 : vector<16x1xf32>
    %95 = vector.broadcast %94 : vector<16x1xf32> to vector<16x32xf32>
    %96 = arith.mulf %91, %95 : vector<16x32xf32>
    %97 = vector.broadcast %77 : vector<1x32xf32> to vector<16x32xf32>
    %98 = arith.mulf %96, %97 : vector<16x32xf32>
    %99 = vector.broadcast %78 : vector<1x32xf32> to vector<16x32xf32>
    %100 = arith.addf %98, %99 : vector<16x32xf32>
    %cst_41 = arith.constant 0.000000e+00 : f32
    %101 = vector.broadcast %cst_41 : f32 to vector<16x32xf32>
    %102 = arith.maximumf %100, %101 : vector<16x32xf32>
    %103 = vector.extract_strided_slice %5 {offsets = [0, 32], sizes = [16, 32], strides = [1, 1]} : vector<16x64xf32> to vector<16x32xf32>
    %c0_42 = arith.constant 0 : index
    %c0_43 = arith.constant 0 : index
    %104 = vector.load %arg12[%c0_42, %c0_43] : memref<1x32xf32, #tpu.memory_space<vmem>>, vector<1x32xf32>
    %105 = vector.broadcast %104 : vector<1x32xf32> to vector<16x32xf32>
    %106 = arith.mulf %103, %105 : vector<16x32xf32>
    %c0_44 = arith.constant 0 : index
    %c0_45 = arith.constant 0 : index
    %107 = vector.load %arg13[%c0_44, %c0_45] : memref<1x32xf32, #tpu.memory_space<vmem>>, vector<1x32xf32>
    %108 = vector.broadcast %107 : vector<1x32xf32> to vector<16x32xf32>
    %109 = arith.addf %106, %108 : vector<16x32xf32>
    %cst_46 = arith.constant 0.000000e+00 : f32
    %110 = vector.broadcast %cst_46 : f32 to vector<16x32xf32>
    %111 = arith.maximumf %109, %110 : vector<16x32xf32>
    %112 = tpu.iota {dimensions = array<i32: 1>} : vector<48x16xi32>
    %c0_47 = arith.constant 0 : index
    %c0_48 = arith.constant 0 : index
    %113 = vector.load %arg1[%c0_47, %c0_48] : memref<48x1xi32, #tpu.memory_space<vmem>>, vector<48x1xi32>
    %114 = vector.broadcast %113 : vector<48x1xi32> to vector<48x16xi32>
    %115 = arith.cmpi eq, %112, %114 : vector<48x16xi32>
    %116 = arith.extui %115 : vector<48x16xi1> to vector<48x16xi32>
    %117 = arith.sitofp %116 : vector<48x16xi32> to vector<48x16xf32>
    %118 = tpu.iota {dimensions = array<i32: 0>} : vector<16x48xi32>
    %c0_49 = arith.constant 0 : index
    %c0_50 = arith.constant 0 : index
    %119 = vector.load %arg2[%c0_49, %c0_50] : memref<1x48xi32, #tpu.memory_space<vmem>>, vector<1x48xi32>
    %120 = vector.broadcast %119 : vector<1x48xi32> to vector<16x48xi32>
    %121 = arith.cmpi eq, %118, %120 : vector<16x48xi32>
    %122 = arith.extui %121 : vector<16x48xi1> to vector<16x48xi32>
    %123 = arith.sitofp %122 : vector<16x48xi32> to vector<16x48xf32>
    %124 = tpu.iota {dimensions = array<i32: 1>} : vector<48x2xi32>
    %c0_51 = arith.constant 0 : index
    %c0_52 = arith.constant 0 : index
    %125 = vector.load %arg3[%c0_51, %c0_52] : memref<48x1xi32, #tpu.memory_space<vmem>>, vector<48x1xi32>
    %126 = vector.broadcast %125 : vector<48x1xi32> to vector<48x2xi32>
    %127 = arith.cmpi eq, %124, %126 : vector<48x2xi32>
    %128 = arith.extui %127 : vector<48x2xi1> to vector<48x2xi32>
    %129 = arith.sitofp %128 : vector<48x2xi32> to vector<48x2xf32>
    %cst_53 = arith.constant dense<0.000000e+00> : vector<16x2xf32>
    %130 = tpu.matmul %123, %129, %cst_53 {dimension_numbers = #tpu.dot_dimension_numbers<[1], [0], [0], [1], [0, 0, 1, 1], [], []>} : vector<16x48xf32>, vector<48x2xf32>, vector<16x2xf32> -> vector<16x2xf32>
    %cst_54 = arith.constant 1.000000e+00 : f32
    %131 = vector.broadcast %cst_54 : f32 to vector<16x2xf32>
    %132 = arith.addf %130, %131 : vector<16x2xf32>
    %133 = math.rsqrt %132 : vector<16x2xf32>
    %134 = tpu.iota {dimensions = array<i32: 1>} : vector<16x64xi32>
    %c32_i32 = arith.constant 32 : i32
    %135 = vector.broadcast %c32_i32 : i32 to vector<16x64xi32>
    %136 = arith.cmpi sge, %134, %135 : vector<16x64xi32>
    %137 = arith.extui %136 : vector<16x64xi1> to vector<16x64xi32>
    %138 = arith.sitofp %137 : vector<16x64xi32> to vector<16x64xf32>
    %139 = vector.extract_strided_slice %133 {offsets = [0, 0], sizes = [16, 1], strides = [1, 1]} : vector<16x2xf32> to vector<16x1xf32>
    %cst_55 = arith.constant 1.000000e+00 : f32
    %140 = vector.broadcast %cst_55 : f32 to vector<16x64xf32>
    %141 = arith.subf %140, %138 : vector<16x64xf32>
    %142 = vector.broadcast %139 : vector<16x1xf32> to vector<16x64xf32>
    %143 = arith.mulf %142, %141 : vector<16x64xf32>
    %144 = vector.extract_strided_slice %133 {offsets = [0, 1], sizes = [16, 1], strides = [1, 1]} : vector<16x2xf32> to vector<16x1xf32>
    %145 = vector.broadcast %144 : vector<16x1xf32> to vector<16x64xf32>
    %146 = arith.mulf %145, %138 : vector<16x64xf32>
    %147 = arith.addf %143, %146 : vector<16x64xf32>
    %c0_56 = arith.constant 0 : index
    %c0_57 = arith.constant 0 : index
    %148 = vector.load %arg14[%c0_56, %c0_57] : memref<32x64xf32, #tpu.memory_space<vmem>>, vector<32x64xf32>
    %cst_58 = arith.constant dense<0.000000e+00> : vector<16x64xf32>
    %149 = tpu.matmul %111, %148, %cst_58 {dimension_numbers = #tpu.dot_dimension_numbers<[1], [0], [0], [1], [0, 0, 1, 1], [], []>} : vector<16x32xf32>, vector<32x64xf32>, vector<16x64xf32> -> vector<16x64xf32>
    %cst_59 = arith.constant dense<0.000000e+00> : vector<48x64xf32>
    %150 = tpu.matmul %117, %149, %cst_59 {dimension_numbers = #tpu.dot_dimension_numbers<[1], [0], [0], [1], [0, 0, 1, 1], [], []>} : vector<48x16xf32>, vector<16x64xf32>, vector<48x64xf32> -> vector<48x64xf32>
    %cst_60 = arith.constant dense<0.000000e+00> : vector<48x2xf32>
    %151 = tpu.matmul %117, %133, %cst_60 {dimension_numbers = #tpu.dot_dimension_numbers<[1], [0], [0], [1], [0, 0, 1, 1], [], []>} : vector<48x16xf32>, vector<16x2xf32>, vector<48x2xf32> -> vector<48x2xf32>
    %152 = arith.mulf %129, %151 : vector<48x2xf32>
    %153 = tpu.iota {dimensions = array<i32: 1>} : vector<48x64xi32>
    %c32_i32_61 = arith.constant 32 : i32
    %154 = vector.broadcast %c32_i32_61 : i32 to vector<48x64xi32>
    %155 = arith.cmpi sge, %153, %154 : vector<48x64xi32>
    %156 = arith.extui %155 : vector<48x64xi1> to vector<48x64xi32>
    %157 = arith.sitofp %156 : vector<48x64xi32> to vector<48x64xf32>
    %158 = vector.extract_strided_slice %152 {offsets = [0, 0], sizes = [48, 1], strides = [1, 1]} : vector<48x2xf32> to vector<48x1xf32>
    %cst_62 = arith.constant 1.000000e+00 : f32
    %159 = vector.broadcast %cst_62 : f32 to vector<48x64xf32>
    %160 = arith.subf %159, %157 : vector<48x64xf32>
    %161 = vector.broadcast %158 : vector<48x1xf32> to vector<48x64xf32>
    %162 = arith.mulf %161, %160 : vector<48x64xf32>
    %163 = vector.extract_strided_slice %152 {offsets = [0, 1], sizes = [48, 1], strides = [1, 1]} : vector<48x2xf32> to vector<48x1xf32>
    %164 = vector.broadcast %163 : vector<48x1xf32> to vector<48x64xf32>
    %165 = arith.mulf %164, %157 : vector<48x64xf32>
    %166 = arith.addf %162, %165 : vector<48x64xf32>
    %167 = arith.mulf %166, %150 : vector<48x64xf32>
    %cst_63 = arith.constant dense<0.000000e+00> : vector<16x64xf32>
    %168 = tpu.matmul %123, %167, %cst_63 {dimension_numbers = #tpu.dot_dimension_numbers<[1], [0], [0], [1], [0, 0, 1, 1], [], []>} : vector<16x48xf32>, vector<48x64xf32>, vector<16x64xf32> -> vector<16x64xf32>
    %169 = arith.mulf %147, %168 : vector<16x64xf32>
    %170 = arith.mulf %147, %147 : vector<16x64xf32>
    %171 = arith.mulf %170, %149 : vector<16x64xf32>
    %172 = arith.addf %169, %171 : vector<16x64xf32>
    %c0_64 = arith.constant 0 : index
    %c0_65 = arith.constant 0 : index
    %173 = vector.load %arg15[%c0_64, %c0_65] : memref<1x64xf32, #tpu.memory_space<vmem>>, vector<1x64xf32>
    %174 = vector.broadcast %173 : vector<1x64xf32> to vector<16x64xf32>
    %175 = arith.addf %172, %174 : vector<16x64xf32>
    %176 = vector.extract_strided_slice %175 {offsets = [0, 0], sizes = [16, 32], strides = [1, 1]} : vector<16x64xf32> to vector<16x32xf32>
    %177 = vector.extract_strided_slice %175 {offsets = [0, 32], sizes = [16, 32], strides = [1, 1]} : vector<16x64xf32> to vector<16x32xf32>
    %178 = arith.addf %176, %177 : vector<16x32xf32>
    %c0_66 = arith.constant 0 : index
    %c0_67 = arith.constant 0 : index
    %179 = vector.load %arg16[%c0_66, %c0_67] : memref<32x32xf32, #tpu.memory_space<vmem>>, vector<32x32xf32>
    %cst_68 = arith.constant dense<0.000000e+00> : vector<16x32xf32>
    %180 = tpu.matmul %178, %179, %cst_68 {dimension_numbers = #tpu.dot_dimension_numbers<[1], [0], [0], [1], [0, 0, 1, 1], [], []>} : vector<16x32xf32>, vector<32x32xf32>, vector<16x32xf32> -> vector<16x32xf32>
    %c0_69 = arith.constant 0 : index
    %c0_70 = arith.constant 0 : index
    %181 = vector.load %arg17[%c0_69, %c0_70] : memref<1x32xf32, #tpu.memory_space<vmem>>, vector<1x32xf32>
    %182 = vector.broadcast %181 : vector<1x32xf32> to vector<16x32xf32>
    %183 = arith.addf %180, %182 : vector<16x32xf32>
    %184 = arith.addf %183, %111 : vector<16x32xf32>
    %c0_71 = arith.constant 0 : index
    %c0_72 = arith.constant 0 : index
    %185 = vector.load %arg18[%c0_71, %c0_72] : memref<1x32xf32, #tpu.memory_space<vmem>>, vector<1x32xf32>
    %186 = vector.broadcast %185 : vector<1x32xf32> to vector<16x32xf32>
    %187 = arith.mulf %184, %186 : vector<16x32xf32>
    %c0_73 = arith.constant 0 : index
    %c0_74 = arith.constant 0 : index
    %188 = vector.load %arg19[%c0_73, %c0_74] : memref<1x32xf32, #tpu.memory_space<vmem>>, vector<1x32xf32>
    %189 = vector.broadcast %188 : vector<1x32xf32> to vector<16x32xf32>
    %190 = arith.addf %187, %189 : vector<16x32xf32>
    %cst_75 = arith.constant 0.000000e+00 : f32
    %191 = vector.broadcast %cst_75 : f32 to vector<16x32xf32>
    %192 = arith.maximumf %190, %191 : vector<16x32xf32>
    %c0_76 = arith.constant 0 : index
    %c0_77 = arith.constant 0 : index
    %193 = vector.load %arg20[%c0_76, %c0_77] : memref<32x128xf32, #tpu.memory_space<vmem>>, vector<32x128xf32>
    %cst_78 = arith.constant dense<0.000000e+00> : vector<16x128xf32>
    %194 = tpu.matmul %102, %193, %cst_78 {dimension_numbers = #tpu.dot_dimension_numbers<[1], [0], [0], [1], [0, 0, 1, 1], [], []>} : vector<16x32xf32>, vector<32x128xf32>, vector<16x128xf32> -> vector<16x128xf32>
    %c0_79 = arith.constant 0 : index
    %c0_80 = arith.constant 0 : index
    %195 = vector.load %arg21[%c0_79, %c0_80] : memref<32x128xf32, #tpu.memory_space<vmem>>, vector<32x128xf32>
    %cst_81 = arith.constant dense<0.000000e+00> : vector<16x128xf32>
    %196 = tpu.matmul %192, %195, %cst_81 {dimension_numbers = #tpu.dot_dimension_numbers<[1], [0], [0], [1], [0, 0, 1, 1], [], []>} : vector<16x32xf32>, vector<32x128xf32>, vector<16x128xf32> -> vector<16x128xf32>
    %197 = arith.addf %194, %196 : vector<16x128xf32>
    %c0_82 = arith.constant 0 : index
    %c0_83 = arith.constant 0 : index
    %198 = vector.load %arg22[%c0_82, %c0_83] : memref<1x128xf32, #tpu.memory_space<vmem>>, vector<1x128xf32>
    %199 = vector.broadcast %198 : vector<1x128xf32> to vector<16x128xf32>
    %200 = arith.addf %197, %199 : vector<16x128xf32>
    %201 = math.tanh %200 : vector<16x128xf32>
    %c0_84 = arith.constant 0 : index
    %c0_85 = arith.constant 0 : index
    %202 = vector.load %arg23[%c0_84, %c0_85] : memref<16x128xf32, #tpu.memory_space<vmem>>, vector<16x128xf32>
    tpu.vector_store %arg23[%c0_84, %c0_85], %201 {strides = array<i32>} : memref<16x128xf32, #tpu.memory_space<vmem>>, vector<16x128xf32>,
    return
  }
}

</mosaic_0001>

<llo_original>
// kernel: tpu_custom_call.1
$region0: #{tpu_custom_call.1}
  #allocation0 [shape = 'u32[]', space=smem, size = 0x4, offset = 0x4, fixed_abs, tag = 'smem constant byte address 0x4 - core index']
  #allocation1 [shape = 'u32[144,128]{1,0:T(1,128)}', space=vmem, size = 0x12000, scoped, tag = 'internal scratch']
  %s0 = inlined_call_operand.vmem [shape: f32[16,8], index: 0, kind: input, shape index: {}]
  %s1 = inlined_call_operand.vmem [shape: s32[48,1], index: 1, kind: input, shape index: {}]
  %s2 = inlined_call_operand.vmem [shape: s32[1,48], index: 2, kind: input, shape index: {}]
  %s3 = inlined_call_operand.vmem [shape: s32[48,1], index: 3, kind: input, shape index: {}]
  %s4 = inlined_call_operand.hbm [shape: f32[8,64], index: 4, kind: input, shape index: {}]
  %s5 = inlined_call_operand.vmem [shape: f32[1,64], index: 5, kind: input, shape index: {}]
  %s6 = inlined_call_operand.vmem [shape: f32[1,32], index: 6, kind: input, shape index: {}]
  %s7 = inlined_call_operand.hbm [shape: f32[1,32], index: 7, kind: input, shape index: {}]
  %s8 = inlined_call_operand.vmem [shape: f32[32,96], index: 8, kind: input, shape index: {}]
  %s9 = inlined_call_operand.hbm [shape: f32[1,96], index: 9, kind: input, shape index: {}]
  %s10 = inlined_call_operand.hbm [shape: f32[1,32], index: 10, kind: input, shape index: {}]
  %s11 = inlined_call_operand.hbm [shape: f32[1,32], index: 11, kind: input, shape index: {}]
  %s12 = inlined_call_operand.vmem [shape: f32[1,32], index: 12, kind: input, shape index: {}]
  %s13 = inlined_call_operand.vmem [shape: f32[1,32], index: 13, kind: input, shape index: {}]
  %s14 = inlined_call_operand.vmem [shape: f32[32,64], index: 14, kind: input, shape index: {}]
  %s15 = inlined_call_operand.vmem [shape: f32[1,64], index: 15, kind: input, shape index: {}]
  %s16 = inlined_call_operand.vmem [shape: f32[32,32], index: 16, kind: input, shape index: {}]
  %s17 = inlined_call_operand.vmem [shape: f32[1,32], index: 17, kind: input, shape index: {}]
  %s18 = inlined_call_operand.vmem [shape: f32[1,32], index: 18, kind: input, shape index: {}]
  %s19 = inlined_call_operand.vmem [shape: f32[1,32], index: 19, kind: input, shape index: {}]
  %s20 = inlined_call_operand.vmem [shape: f32[32,128], index: 20, kind: input, shape index: {}]
  %s21 = inlined_call_operand.vmem [shape: f32[32,128], index: 21, kind: input, shape index: {}]
  %s22 = inlined_call_operand.vmem [shape: f32[1,128], index: 22, kind: input, shape index: {}]
  %s23 = inlined_call_operand.hbm [shape: f32[16,128], index: 23, kind: output, shape index: {}]
  %s24 = sld [smem:[#allocation0]]
  $region122: #{tpu_custom_call.1} parent=0
    _
  %s26 = ssub.s32 1, %s24
  %s27 = scalar_select 0, %s26, %s24
  $region1: #{tpu_custom_call.1} parent=0
    #allocation2 [shape = 'u8[4096]{0}', space=vmem, size = 0x1000, scoped, tag = 'input window, operand 4, single buffered']
    #allocation3 [shape = 's32[1]{0}', space=sflag, size = 0x4, scoped, tag = 'scoped memory for tpu_custom_call.1']
    #allocation4 [shape = 's32[1]{0}', space=sflag, size = 0x4, scoped, tag = 'scoped memory for tpu_custom_call.1']
    #allocation5 [shape = 'u8[512]{0}', space=vmem, size = 0x400, scoped, tag = 'input window, operand 7, single buffered']
    #allocation6 [shape = 's32[1]{0}', space=sflag, size = 0x4, scoped, tag = 'scoped memory for tpu_custom_call.1']
    #allocation7 [shape = 'u8[512]{0}', space=vmem, size = 0x400, scoped, tag = 'input window, operand 9, single buffered']
    #allocation8 [shape = 'u8[512]{0}', space=vmem, size = 0x400, scoped, tag = 'input window, operand 10, single buffered']
    #allocation9 [shape = 's32[1]{0}', space=sflag, size = 0x4, scoped, tag = 'scoped memory for tpu_custom_call.1']
    #allocation10 [shape = 'u8[512]{0}', space=vmem, size = 0x400, scoped, tag = 'input window, operand 11, single buffered']
    #allocation11 [shape = 'u8[8192]{0}', space=vmem, size = 0x2000, scoped, tag = 'output window, operand 0, single buffered']
    %28 = vsyncpa [#allocation3], 0
    %29 = vsyncpa [#allocation6], 0
    %30 = vsyncpa [#allocation9], 0
    %31 = vsyncpa [#allocation4], 0
    // Predicated region
    $region2: #{tpu_custom_call.1} parent=1 // pred_check
      _
    $region3: #{tpu_custom_call.1} parent=1 // pred_check_branch
      %33 = sbr.rel (0) target = $region5
    $region4: #{tpu_custom_call.1} parent=1 // pred_region
      _
    $region5: #{tpu_custom_call.1} parent=1 // pred_fallthru
      _
    // Predicated region
    $region6: #{tpu_custom_call.1} parent=1 // pred_check
      _
    $region7: #{tpu_custom_call.1} parent=1 // pred_check_branch
      %35 = sbr.rel (0) target = $region9
    $region8: #{tpu_custom_call.1} parent=1 // pred_region
      _
    $region9: #{tpu_custom_call.1} parent=1 // pred_fallthru
      _
    // Predicated region
    $region10: #{tpu_custom_call.1} parent=1 // pred_check
      _
    $region11: #{tpu_custom_call.1} parent=1 // pred_check_branch
      %37 = sbr.rel (0) target = $region13
    $region12: #{tpu_custom_call.1} parent=1 // pred_region
      _
    $region13: #{tpu_custom_call.1} parent=1 // pred_fallthru
      _
    // Predicated region
    $region14: #{tpu_custom_call.1} parent=1 // pred_check
      _
    $region15: #{tpu_custom_call.1} parent=1 // pred_check_branch
      %39 = sbr.rel (0) target = $region17
    $region16: #{tpu_custom_call.1} parent=1 // pred_region
      _
    $region17: #{tpu_custom_call.1} parent=1 // pred_fallthru
      _
    // Predicated region
    $region18: #{tpu_custom_call.1} parent=1 // pred_check
      _
    $region19: #{tpu_custom_call.1} parent=1 // pred_check_branch
      %41 = sbr.rel (0) target = $region21
    $region20: #{tpu_custom_call.1} parent=1 // pred_region
      %s43 = ssub.s32 128, 128
      %44 = vsyncadd [#allocation3], %s43
      %s46 = sshll.u32 [#allocation2], 4
      %s47 = int_to_ptr.vmem [resolvable:$true] %s46
      %49 = dma.hbm_to_vmem [thread:$0]  %s4, 128, %s47, [#allocation3]
    $region21: #{tpu_custom_call.1} parent=1 // pred_fallthru
      _
    // Predicated region
    $region22: #{tpu_custom_call.1} parent=1 // pred_check
      _
    $region23: #{tpu_custom_call.1} parent=1 // pred_check_branch
      %51 = sbr.rel (0) target = $region25
    $region24: #{tpu_custom_call.1} parent=1 // pred_region
      _
    $region25: #{tpu_custom_call.1} parent=1 // pred_fallthru
      _
    // Predicated region
    $region26: #{tpu_custom_call.1} parent=1 // pred_check
      _
    $region27: #{tpu_custom_call.1} parent=1 // pred_check_branch
      %53 = sbr.rel (0) target = $region29
    $region28: #{tpu_custom_call.1} parent=1 // pred_region
      _
    $region29: #{tpu_custom_call.1} parent=1 // pred_fallthru
      _
    // Predicated region
    $region30: #{tpu_custom_call.1} parent=1 // pred_check
      _
    $region31: #{tpu_custom_call.1} parent=1 // pred_check_branch
      %55 = sbr.rel (0) target = $region33
    $region32: #{tpu_custom_call.1} parent=1 // pred_region
      %s57 = ssub.s32 16, 16
      %58 = vsyncadd [#allocation6], %s57
      %s60 = sshll.u32 [#allocation5], 4
      %s61 = int_to_ptr.vmem [resolvable:$true] %s60
      %63 = dma.hbm_to_vmem [thread:$0]  %s7, 16, %s61, [#allocation6]
    $region33: #{tpu_custom_call.1} parent=1 // pred_fallthru
      _
    // Predicated region
    $region34: #{tpu_custom_call.1} parent=1 // pred_check
      _
    $region35: #{tpu_custom_call.1} parent=1 // pred_check_branch
      %65 = sbr.rel (0) target = $region37
    $region36: #{tpu_custom_call.1} parent=1 // pred_region
      _
    $region37: #{tpu_custom_call.1} parent=1 // pred_fallthru
      _
    // Predicated region
    $region38: #{tpu_custom_call.1} parent=1 // pred_check
      _
    $region39: #{tpu_custom_call.1} parent=1 // pred_check_branch
      %67 = sbr.rel (0) target = $region41
    $region40: #{tpu_custom_call.1} parent=1 // pred_region
      %s69 = ssub.s32 16, 16
      %70 = vsyncadd [#allocation6], %s69
      %s72 = sshll.u32 [#allocation7], 4
      %s73 = int_to_ptr.vmem [resolvable:$true] %s72
      %75 = dma.hbm_to_vmem [thread:$0]  %s9, 16, %s73, [#allocation6]
    $region41: #{tpu_custom_call.1} parent=1 // pred_fallthru
      _
    // Predicated region
    $region42: #{tpu_custom_call.1} parent=1 // pred_check
      _
    $region43: #{tpu_custom_call.1} parent=1 // pred_check_branch
      %77 = sbr.rel (0) target = $region45
    $region44: #{tpu_custom_call.1} parent=1 // pred_region
      %s79 = ssub.s32 16, 16
      %80 = vsyncadd [#allocation9], %s79
      %s82 = sshll.u32 [#allocation8], 4
      %s83 = int_to_ptr.vmem [resolvable:$true] %s82
      %85 = dma.hbm_to_vmem [thread:$0]  %s10, 16, %s83, [#allocation9]
    $region45: #{tpu_custom_call.1} parent=1 // pred_fallthru
      _
    // Predicated region
    $region46: #{tpu_custom_call.1} parent=1 // pred_check
      _
    $region47: #{tpu_custom_call.1} parent=1 // pred_check_branch
      %87 = sbr.rel (0) target = $region49
    $region48: #{tpu_custom_call.1} parent=1 // pred_region
      %s89 = ssub.s32 16, 16
      %90 = vsyncadd [#allocation9], %s89
      %s92 = sshll.u32 [#allocation10], 4
      %s93 = int_to_ptr.vmem [resolvable:$true] %s92
      %95 = dma.hbm_to_vmem [thread:$0]  %s11, 16, %s93, [#allocation9]
    $region49: #{tpu_custom_call.1} parent=1 // pred_fallthru
      _
    // Predicated region
    $region50: #{tpu_custom_call.1} parent=1 // pred_check
      _
    $region51: #{tpu_custom_call.1} parent=1 // pred_check_branch
      %97 = sbr.rel (0) target = $region53
    $region52: #{tpu_custom_call.1} parent=1 // pred_region
      _
    $region53: #{tpu_custom_call.1} parent=1 // pred_fallthru
      _
    // Predicated region
    $region54: #{tpu_custom_call.1} parent=1 // pred_check
      _
    $region55: #{tpu_custom_call.1} parent=1 // pred_check_branch
      %99 = sbr.rel (0) target = $region57
    $region56: #{tpu_custom_call.1} parent=1 // pred_region
      _
    $region57: #{tpu_custom_call.1} parent=1 // pred_fallthru
      _
    // Predicated region
    $region58: #{tpu_custom_call.1} parent=1 // pred_check
      _
    $region59: #{tpu_custom_call.1} parent=1 // pred_check_branch
      %101 = sbr.rel (0) target = $region61
    $region60: #{tpu_custom_call.1} parent=1 // pred_region
      _
    $region61: #{tpu_custom_call.1} parent=1 // pred_fallthru
      _
    // Predicated region
    $region62: #{tpu_custom_call.1} parent=1 // pred_check
      _
    $region63: #{tpu_custom_call.1} parent=1 // pred_check_branch
      %103 = sbr.rel (0) target = $region65
    $region64: #{tpu_custom_call.1} parent=1 // pred_region
      _
    $region65: #{tpu_custom_call.1} parent=1 // pred_fallthru
      _
    // Predicated region
    $region66: #{tpu_custom_call.1} parent=1 // pred_check
      _
    $region67: #{tpu_custom_call.1} parent=1 // pred_check_branch
      %105 = sbr.rel (0) target = $region69
    $region68: #{tpu_custom_call.1} parent=1 // pred_region
      _
    $region69: #{tpu_custom_call.1} parent=1 // pred_fallthru
      _
    // Predicated region
    $region70: #{tpu_custom_call.1} parent=1 // pred_check
      _
    $region71: #{tpu_custom_call.1} parent=1 // pred_check_branch
      %107 = sbr.rel (0) target = $region73
    $region72: #{tpu_custom_call.1} parent=1 // pred_region
      _
    $region73: #{tpu_custom_call.1} parent=1 // pred_fallthru
      _
    // Predicated region
    $region74: #{tpu_custom_call.1} parent=1 // pred_check
      _
    $region75: #{tpu_custom_call.1} parent=1 // pred_check_branch
      %109 = sbr.rel (0) target = $region77
    $region76: #{tpu_custom_call.1} parent=1 // pred_region
      _
    $region77: #{tpu_custom_call.1} parent=1 // pred_fallthru
      _
    // Predicated region
    $region78: #{tpu_custom_call.1} parent=1 // pred_check
      _
    $region79: #{tpu_custom_call.1} parent=1 // pred_check_branch
      %111 = sbr.rel (0) target = $region81
    $region80: #{tpu_custom_call.1} parent=1 // pred_region
      _
    $region81: #{tpu_custom_call.1} parent=1 // pred_fallthru
      _
    // Predicated region
    $region82: #{tpu_custom_call.1} parent=1 // pred_check
      _
    $region83: #{tpu_custom_call.1} parent=1 // pred_check_branch
      %113 = sbr.rel (0) target = $region85
    $region84: #{tpu_custom_call.1} parent=1 // pred_region
      _
    $region85: #{tpu_custom_call.1} parent=1 // pred_fallthru
      _
    // Predicated region
    $region86: #{tpu_custom_call.1} parent=1 // pred_check
      _
    $region87: #{tpu_custom_call.1} parent=1 // pred_check_branch
      %115 = sbr.rel (0) target = $region89
    $region88: #{tpu_custom_call.1} parent=1 // pred_region
      _
    $region89: #{tpu_custom_call.1} parent=1 // pred_fallthru
      _
    // Predicated region
    $region90: #{tpu_custom_call.1} parent=1 // pred_check
      _
    $region91: #{tpu_custom_call.1} parent=1 // pred_check_branch
      %117 = sbr.rel (0) target = $region93
    $region92: #{tpu_custom_call.1} parent=1 // pred_region
      _
    $region93: #{tpu_custom_call.1} parent=1 // pred_fallthru
      _
    // Predicated region
    $region94: #{tpu_custom_call.1} parent=1 // pred_check
      _
    $region95: #{tpu_custom_call.1} parent=1 // pred_check_branch
      %119 = sbr.rel (0) target = $region97
    $region96: #{tpu_custom_call.1} parent=1 // pred_region
      %120 = dma.done [#allocation3], 128
    $region97: #{tpu_custom_call.1} parent=1 // pred_fallthru
      _
    // Predicated region
    $region98: #{tpu_custom_call.1} parent=1 // pred_check
      _
    $region99: #{tpu_custom_call.1} parent=1 // pred_check_branch
      %122 = sbr.rel (0) target = $region101
    $region100: #{tpu_custom_call.1} parent=1 // pred_region
      %123 = dma.done [#allocation6], 16
    $region101: #{tpu_custom_call.1} parent=1 // pred_fallthru
      _
    // Predicated region
    $region102: #{tpu_custom_call.1} parent=1 // pred_check
      _
    $region103: #{tpu_custom_call.1} parent=1 // pred_check_branch
      %125 = sbr.rel (0) target = $region105
    $region104: #{tpu_custom_call.1} parent=1 // pred_region
      %126 = dma.done [#allocation6], 16
    $region105: #{tpu_custom_call.1} parent=1 // pred_fallthru
      _
    // Predicated region
    $region106: #{tpu_custom_call.1} parent=1 // pred_check
      _
    $region107: #{tpu_custom_call.1} parent=1 // pred_check_branch
      %128 = sbr.rel (0) target = $region109
    $region108: #{tpu_custom_call.1} parent=1 // pred_region
      %129 = dma.done [#allocation9], 16
    $region109: #{tpu_custom_call.1} parent=1 // pred_fallthru
      _
    // Predicated region
    $region110: #{tpu_custom_call.1} parent=1 // pred_check
      _
    $region111: #{tpu_custom_call.1} parent=1 // pred_check_branch
      %131 = sbr.rel (0) target = $region113
    $region112: #{tpu_custom_call.1} parent=1 // pred_region
      %132 = dma.done [#allocation9], 16
    $region113: #{tpu_custom_call.1} parent=1 // pred_fallthru
      _
    %v133 = vld [vmem:[%s0] sm:$0xff]
    %v134 = vld [vmem:[%s0 + $0x8] sm:$0xff]
    %v135 = vld [vmem:[#allocation2] sm:$0xff]
    %v136 = vld [vmem:[%s5] sm:$0x1]
    %v138 = vlaneseq
    %v139 = vshrl.u32 %v138, 7
    %v140 = vsub.s32 0, %v139
    %v141 = vrot.slane %v136, %v140
    %vm143 = vcmask 64512
    %v145 = vsel %vm143, %v133, 0
    %v148 = vsel %vm143, %v134, 0
    %150 = vmatprep.subr.mxu0 0.0
    %151 = vmatpush1.msra.mxu0 %v135
    %152 = vmatprep.subr.mxu0 0.0
    %153 = vmatpush1.msra.mxu0 0.0
    %154 = vmatprep.subr.mxu0 0.0
    %155 = vmatpush1.msra.mxu0 0.0
    %156 = vmatprep.subr.mxu0 0.0
    %157 = vmatpush1.msra.mxu0 0.0
    %158 = vmatprep.subr.mxu0 0.0
    %159 = vmatpush1.msra.mxu0 0.0
    %160 = vmatprep.subr.mxu0 0.0
    %161 = vmatpush1.msra.mxu0 0.0
    %162 = vmatprep.subr.mxu0 0.0
    %163 = vmatpush1.msra.mxu0 0.0
    %164 = vmatprep.subr.mxu0 0.0
    %165 = vmatpush1.msra.mxu0 0.0
    %166 = vmatprep.subr.mxu0 0.0
    %167 = vmatpush1.msra.mxu0 0.0
    %168 = vmatprep.subr.mxu0 0.0
    %169 = vmatpush1.msra.mxu0 0.0
    %170 = vmatprep.subr.mxu0 0.0
    %171 = vmatpush1.msra.mxu0 0.0
    %172 = vmatprep.subr.mxu0 0.0
    %173 = vmatpush1.msra.mxu0 0.0
    %174 = vmatprep.subr.mxu0 0.0
    %175 = vmatpush1.msra.mxu0 0.0
    %176 = vmatprep.subr.mxu0 0.0
    %177 = vmatpush1.msra.mxu0 0.0
    %178 = vmatprep.subr.mxu0 0.0
    %179 = vmatpush1.msra.mxu0 0.0
    %180 = vmatprep.subr.mxu0 0.0
    %181 = vmatpush1.msra.mxu0 0.0
    %182 = vmatprep.subr.mxu0 0.0
    %183 = vmatpush1.msra.mxu0 0.0
    %184 = vmatprep.subr.mxu0 0.0
    %185 = vmatpush1.msra.mxu0 0.0
    %186 = vmatprep.subr.mxu0 0.0
    %187 = vmatpush1.msra.mxu0 0.0
    %188 = vmatprep.subr.mxu0 0.0
    %189 = vmatpush1.msra.mxu0 0.0
    %190 = vmatprep.subr.mxu0 0.0
    %191 = vmatpush1.msra.mxu0 0.0
    %192 = vmatprep.subr.mxu0 0.0
    %193 = vmatpush1.msra.mxu0 0.0
    %194 = vmatprep.subr.mxu0 0.0
    %195 = vmatpush1.msra.mxu0 0.0
    %196 = vmatprep.subr.mxu0 0.0
    %197 = vmatpush1.msra.mxu0 0.0
    %198 = vmatprep.subr.mxu0 0.0
    %199 = vmatpush1.msra.mxu0 0.0
    %200 = vmatprep.subr.mxu0 0.0
    %201 = vmatpush1.msra.mxu0 0.0
    %202 = vmatprep.subr.mxu0 0.0
    %203 = vmatpush1.msra.mxu0 0.0
    %204 = vmatprep.subr.mxu0 0.0
    %205 = vmatpush1.msra.mxu0 0.0
    %206 = vmatprep.subr.mxu0 0.0
    %207 = vmatpush1.msra.mxu0 0.0
    %208 = vmatprep.subr.mxu0 0.0
    %209 = vmatpush1.msra.mxu0 0.0
    %210 = vmatprep.subr.mxu0 0.0
    %211 = vmatpush1.msra.mxu0 0.0
    %212 = vmatprep.subr.mxu0 0.0
    %213 = vmatpush1.msra.mxu0 0.0
    %214 = vmatprep.mubr.f32.mxu0 0.0
    %215 = vmatmul.mubr.f32.gmra.mrb[0].mxu0 %v145
    %v216 = vpop.f32.mrb[0].mxu0
    %v217 = vadd.f32 %v141, %v216
    %v218 = vpop.f32.mrb[0].mxu0
    %219 = vmatprep.mubr.f32.mxu0 0.0
    %220 = vmatmul.mubr.f32.gmra.mrb[0].mxu0 %v148
    %v221 = vpop.f32.mrb[0].mxu0
    %v222 = vadd.f32 %v141, %v221
    %v223 = vpop.f32.mrb[0].mxu0
    %224 = vdwg.mxu0
    %v225 = vld [vmem:[%s6] sm:$0x1]
    %v226 = vld [vmem:[#allocation5] sm:$0x1]
    %vm227 = vcmask 261120
    %v228 = vsel %vm227, %v217, 0.0
    %229 = vadd.xlane.f32.xlu0 %v228
    %v230 = vpop.xlane.xlu0 %229
    %v231 = vsel %vm227, %v222, 0.0
    %232 = vadd.xlane.f32.xlu0 %v231
    %v233 = vpop.xlane.xlu0 %232
    %v234 = vrcp.pop 32.0
    %v235 = vmul.f32 %v230, %v234
    %v236 = vmul.f32 %v233, %v234
    %v237 = vsub.f32 %v217, %v235
    %v238 = vsub.f32 %v222, %v236
    %v239 = vmul.f32 %v237, %v237
    %v240 = vmul.f32 %v238, %v238
    %v241 = vsel %vm227, %v239, 0.0
    %242 = vadd.xlane.f32.xlu0 %v241
    %v243 = vpop.xlane.xlu0 %242
    %v244 = vsel %vm227, %v240, 0.0
    %245 = vadd.xlane.f32.xlu0 %v244
    %v246 = vpop.xlane.xlu0 %245
    %v247 = vmul.f32 %v243, %v234
    %v248 = vmul.f32 %v246, %v234
    %v249 = vadd.f32 %v247, 1e-05
    %v250 = vadd.f32 %v248, 1e-05
    %v251 = vrsqrt.pop %v249
    %v252 = vrsqrt.pop %v250
    %v253 = vmul.f32 %v237, %v251
    %v254 = vmul.f32 %v238, %v252
    %v256 = vlaneseq
    %v257 = vshrl.u32 %v256, 7
    %v258 = vsub.s32 0, %v257
    %v259 = vrot.slane %v225, %v258
    %v261 = vmul.f32 %v253, %v259
    %v262 = vmul.f32 %v254, %v259
    %v264 = vlaneseq
    %v265 = vshrl.u32 %v264, 7
    %v266 = vsub.s32 0, %v265
    %v267 = vrot.slane %v226, %v266
    %v269 = vadd.f32 %v261, %v267
    %v270 = vadd.f32 %v262, %v267
    %v271 = vmax.f32 %v269, 0.0
    %v272 = vmax.f32 %v270, 0.0
    %v273 = vld [vmem:[%s8] sm:$0xff]
    %v274 = vld [vmem:[%s8 + $0x8] sm:$0xff]
    %v275 = vld [vmem:[%s8 + $0x10] sm:$0xff]
    %v276 = vld [vmem:[%s8 + $0x18] sm:$0xff]
    %v277 = vld [vmem:[#allocation7] sm:$0x1]
    %v279 = vlaneseq
    %v280 = vshrl.u32 %v279, 7
    %v281 = vsub.s32 0, %v280
    %v282 = vrot.slane %v277, %v281
    %v285 = vsel %vm227, %v271, 0
    %v288 = vsel %vm227, %v272, 0
    %290 = vmatprep.subr.mxu0 0.0
    %291 = vmatpush1.msra.mxu0 %v273
    %292 = vmatprep.subr.mxu0 0.0
    %293 = vmatpush1.msra.mxu0 %v274
    %294 = vmatprep.subr.mxu0 0.0
    %295 = vmatpush1.msra.mxu0 %v275
    %296 = vmatprep.subr.mxu0 0.0
    %297 = vmatpush1.msra.mxu0 %v276
    %298 = vmatprep.subr.mxu0 0.0
    %299 = vmatpush1.msra.mxu0 0.0
    %300 = vmatprep.subr.mxu0 0.0
    %301 = vmatpush1.msra.mxu0 0.0
    %302 = vmatprep.subr.mxu0 0.0
    %303 = vmatpush1.msra.mxu0 0.0
    %304 = vmatprep.subr.mxu0 0.0
    %305 = vmatpush1.msra.mxu0 0.0
    %306 = vmatprep.subr.mxu0 0.0
    %307 = vmatpush1.msra.mxu0 0.0
    %308 = vmatprep.subr.mxu0 0.0
    %309 = vmatpush1.msra.mxu0 0.0
    %310 = vmatprep.subr.mxu0 0.0
    %311 = vmatpush1.msra.mxu0 0.0
    %312 = vmatprep.subr.mxu0 0.0
    %313 = vmatpush1.msra.mxu0 0.0
    %314 = vmatprep.subr.mxu0 0.0
    %315 = vmatpush1.msra.mxu0 0.0
    %316 = vmatprep.subr.mxu0 0.0
    %317 = vmatpush1.msra.mxu0 0.0
    %318 = vmatprep.subr.mxu0 0.0
    %319 = vmatpush1.msra.mxu0 0.0
    %320 = vmatprep.subr.mxu0 0.0
    %321 = vmatpush1.msra.mxu0 0.0
    %322 = vmatprep.subr.mxu0 0.0
    %323 = vmatpush1.msra.mxu0 0.0
    %324 = vmatprep.subr.mxu0 0.0
    %325 = vmatpush1.msra.mxu0 0.0
    %326 = vmatprep.subr.mxu0 0.0
    %327 = vmatpush1.msra.mxu0 0.0
    %328 = vmatprep.subr.mxu0 0.0
    %329 = vmatpush1.msra.mxu0 0.0
    %330 = vmatprep.subr.mxu0 0.0
    %331 = vmatpush1.msra.mxu0 0.0
    %332 = vmatprep.subr.mxu0 0.0
    %333 = vmatpush1.msra.mxu0 0.0
    %334 = vmatprep.subr.mxu0 0.0
    %335 = vmatpush1.msra.mxu0 0.0
    %336 = vmatprep.subr.mxu0 0.0
    %337 = vmatpush1.msra.mxu0 0.0
    %338 = vmatprep.subr.mxu0 0.0
    %339 = vmatpush1.msra.mxu0 0.0
    %340 = vmatprep.subr.mxu0 0.0
    %341 = vmatpush1.msra.mxu0 0.0
    %342 = vmatprep.subr.mxu0 0.0
    %343 = vmatpush1.msra.mxu0 0.0
    %344 = vmatprep.subr.mxu0 0.0
    %345 = vmatpush1.msra.mxu0 0.0
    %346 = vmatprep.subr.mxu0 0.0
    %347 = vmatpush1.msra.mxu0 0.0
    %348 = vmatprep.subr.mxu0 0.0
    %349 = vmatpush1.msra.mxu0 0.0
    %350 = vmatprep.subr.mxu0 0.0
    %351 = vmatpush1.msra.mxu0 0.0
    %352 = vmatprep.subr.mxu0 0.0
    %353 = vmatpush1.msra.mxu0 0.0
    %354 = vmatprep.mubr.f32.mxu0 0.0
    %355 = vmatmul.mubr.f32.gmra.mrb[0].mxu0 %v285
    %v356 = vpop.f32.mrb[0].mxu0
    %v357 = vadd.f32 %v282, %v356
    %v358 = vpop.f32.mrb[0].mxu0
    %359 = vmatprep.mubr.f32.mxu0 0.0
    %360 = vmatmul.mubr.f32.gmra.mrb[0].mxu0 %v288
    %v361 = vpop.f32.mrb[0].mxu0
    %v362 = vadd.f32 %v282, %v361
    %v363 = vpop.f32.mrb[0].mxu0
    %364 = vdwg.mxu0
    %v365 = vmul.f32 %v357, %v357
    %v366 = vmul.f32 %v362, %v362
    %v367 = vsel %vm227, %v365, 0.0
    %368 = vadd.xlane.f32.xlu0 %v367
    %v369 = vpop.xlane.xlu0 %368
    %v370 = vsel %vm227, %v366, 0.0
    %371 = vadd.xlane.f32.xlu0 %v370
    %v372 = vpop.xlane.xlu0 %371
    %v373 = vadd.f32 %v369, %v372
    %v374 = vrot.slane %v373, 4
    %v375 = vadd.f32 %v373, %v374
    %v376 = vrot.slane %v375, 2
    %v377 = vadd.f32 %v375, %v376
    %v378 = vrot.slane %v377, 1
    %v379 = vadd.f32 %v377, %v378
    %v380 = vrsqrt.pop %v379
    %v381 = vmul.f32 %v357, %v380
    %v382 = vmul.f32 %v362, %v380
    %385 = vrot.lane.b32.xlu0 %v365, 96
    %v386 = vpop.permute.xlu0 %385
    %387 = vrot.lane.b32.xlu0 %v366, 96
    %v388 = vpop.permute.xlu0 %387
    %v391 = vsel %vm227, %v386, 0.0
    %392 = vadd.xlane.f32.xlu0 %v391
    %v393 = vpop.xlane.xlu0 %392
    %v394 = vsel %vm227, %v388, 0.0
    %395 = vadd.xlane.f32.xlu0 %v394
    %v396 = vpop.xlane.xlu0 %395
    %v397 = vadd.f32 %v393, %v396
    %v398 = vrot.slane %v397, 4
    %v399 = vadd.f32 %v397, %v398
    %v400 = vrot.slane %v399, 2
    %v401 = vadd.f32 %v399, %v400
    %v402 = vrot.slane %v401, 1
    %v403 = vadd.f32 %v401, %v402
    %v404 = vrsqrt.pop %v403
    %v405 = vmul.f32 %v357, %v404
    %v406 = vmul.f32 %v362, %v404
    %409 = vrot.lane.b32.xlu0 %v405, 96
    %v410 = vpop.permute.xlu0 %409
    %411 = vrot.lane.b32.xlu0 %v406, 96
    %v412 = vpop.permute.xlu0 %411
    %415 = vxpose.xlu0.b32.start [1/16] %v410, 128
    %416 = vxpose.xlu0.b32.cont [2/16] %v412, 128
    %417 = vxpose.xlu0.b32.cont [3/16] 0.0, 128
    %418 = vxpose.xlu0.b32.cont [4/16] 0.0, 128
    %419 = vxpose.xlu0.b32.cont [5/16] 0.0, 128
    %420 = vxpose.xlu0.b32.cont [6/16] 0.0, 128
    %421 = vxpose.xlu0.b32.cont [7/16] 0.0, 128
    %422 = vxpose.xlu0.b32.cont [8/16] 0.0, 128
    %423 = vxpose.xlu0.b32.cont [9/16] 0.0, 128
    %424 = vxpose.xlu0.b32.cont [10/16] 0.0, 128
    %425 = vxpose.xlu0.b32.cont [11/16] 0.0, 128
    %426 = vxpose.xlu0.b32.cont [12/16] 0.0, 128
    %427 = vxpose.xlu0.b32.cont [13/16] 0.0, 128
    %428 = vxpose.xlu0.b32.cont [14/16] 0.0, 128
    %429 = vxpose.xlu0.b32.cont [15/16] 0.0, 128
    %430 = vxpose.xlu0.b32.end [16/16] 0.0, 128
    %v431 = vpop.trf.xlu0
    %v432 = vpop.trf.xlu0
    %v433 = vpop.trf.xlu0
    %v434 = vpop.trf.xlu0
    %v435 = vpop.trf.xlu0
    %v436 = vpop.trf.xlu0
    %v437 = vpop.trf.xlu0
    %v438 = vpop.trf.xlu0
    %v439 = vpop.trf.xlu0
    %v440 = vpop.trf.xlu0
    %v441 = vpop.trf.xlu0
    %v442 = vpop.trf.xlu0
    %v443 = vpop.trf.xlu0
    %v444 = vpop.trf.xlu0
    %v445 = vpop.trf.xlu0
    %v446 = vpop.trf.xlu0
    %449 = vrot.lane.b32.xlu0 %v357, 64
    %v450 = vpop.permute.xlu0 %449
    %451 = vrot.lane.b32.xlu0 %v362, 64
    %v452 = vpop.permute.xlu0 %451
    %vm455 = vcmask 130048
    %v457 = vsel %vm455, %v431, 0
    %v460 = vsel %vm455, %v432, 0
    %v463 = vsel %vm455, %v433, 0
    %v466 = vsel %vm455, %v434, 0
    %468 = vmatprep.subr.mxu0 0.0
    %469 = vmatpush1.msra.mxu0 %v450
    %470 = vmatprep.subr.mxu0 0.0
    %471 = vmatpush1.msra.mxu0 %v452
    %472 = vmatprep.subr.mxu0 0.0
    %473 = vmatpush1.msra.mxu0 0.0
    %474 = vmatprep.subr.mxu0 0.0
    %475 = vmatpush1.msra.mxu0 0.0
    %476 = vmatprep.subr.mxu0 0.0
    %477 = vmatpush1.msra.mxu0 0.0
    %478 = vmatprep.subr.mxu0 0.0
    %479 = vmatpush1.msra.mxu0 0.0
    %480 = vmatprep.subr.mxu0 0.0
    %481 = vmatpush1.msra.mxu0 0.0
    %482 = vmatprep.subr.mxu0 0.0
    %483 = vmatpush1.msra.mxu0 0.0
    %484 = vmatprep.subr.mxu0 0.0
    %485 = vmatpush1.msra.mxu0 0.0
    %486 = vmatprep.subr.mxu0 0.0
    %487 = vmatpush1.msra.mxu0 0.0
    %488 = vmatprep.subr.mxu0 0.0
    %489 = vmatpush1.msra.mxu0 0.0
    %490 = vmatprep.subr.mxu0 0.0
    %491 = vmatpush1.msra.mxu0 0.0
    %492 = vmatprep.subr.mxu0 0.0
    %493 = vmatpush1.msra.mxu0 0.0
    %494 = vmatprep.subr.mxu0 0.0
    %495 = vmatpush1.msra.mxu0 0.0
    %496 = vmatprep.subr.mxu0 0.0
    %497 = vmatpush1.msra.mxu0 0.0
    %498 = vmatprep.subr.mxu0 0.0
    %499 = vmatpush1.msra.mxu0 0.0
    %500 = vmatprep.subr.mxu0 0.0
    %501 = vmatpush1.msra.mxu0 0.0
    %502 = vmatprep.subr.mxu0 0.0
    %503 = vmatpush1.msra.mxu0 0.0
    %504 = vmatprep.subr.mxu0 0.0
    %505 = vmatpush1.msra.mxu0 0.0
    %506 = vmatprep.subr.mxu0 0.0
    %507 = vmatpush1.msra.mxu0 0.0
    %508 = vmatprep.subr.mxu0 0.0
    %509 = vmatpush1.msra.mxu0 0.0
    %510 = vmatprep.subr.mxu0 0.0
    %511 = vmatpush1.msra.mxu0 0.0
    %512 = vmatprep.subr.mxu0 0.0
    %513 = vmatpush1.msra.mxu0 0.0
    %514 = vmatprep.subr.mxu0 0.0
    %515 = vmatpush1.msra.mxu0 0.0
    %516 = vmatprep.subr.mxu0 0.0
    %517 = vmatpush1.msra.mxu0 0.0
    %518 = vmatprep.subr.mxu0 0.0
    %519 = vmatpush1.msra.mxu0 0.0
    %520 = vmatprep.subr.mxu0 0.0
    %521 = vmatpush1.msra.mxu0 0.0
    %522 = vmatprep.subr.mxu0 0.0
    %523 = vmatpush1.msra.mxu0 0.0
    %524 = vmatprep.subr.mxu0 0.0
    %525 = vmatpush1.msra.mxu0 0.0
    %526 = vmatprep.subr.mxu0 0.0
    %527 = vmatpush1.msra.mxu0 0.0
    %528 = vmatprep.subr.mxu0 0.0
    %529 = vmatpush1.msra.mxu0 0.0
    %530 = vmatprep.subr.mxu0 0.0
    %531 = vmatpush1.msra.mxu0 0.0
    %532 = vmatprep.mubr.f32.mxu0 0.0
    %533 = vmatmul.mubr.f32.gmra.mrb[0].mxu0 %v457
    %v534 = vpop.f32.mrb[0].mxu0
    %v535 = vadd.f32 0.0, %v534
    %v536 = vpop.f32.mrb[0].mxu0
    %537 = vmatprep.mubr.f32.mxu0 0.0
    %538 = vmatmul.mubr.f32.gmra.mrb[0].mxu0 %v460
    %v539 = vpop.f32.mrb[0].mxu0
    %v540 = vadd.f32 0.0, %v539
    %v541 = vpop.f32.mrb[0].mxu0
    %542 = vmatprep.mubr.f32.mxu0 0.0
    %543 = vmatmul.mubr.f32.gmra.mrb[0].mxu0 %v463
    %v544 = vpop.f32.mrb[0].mxu0
    %v545 = vadd.f32 0.0, %v544
    %v546 = vpop.f32.mrb[0].mxu0
    %547 = vmatprep.mubr.f32.mxu0 0.0
    %548 = vmatmul.mubr.f32.gmra.mrb[0].mxu0 %v466
    %v549 = vpop.f32.mrb[0].mxu0
    %v550 = vadd.f32 0.0, %v549
    %v551 = vpop.f32.mrb[0].mxu0
    %552 = vdwg.mxu0
    %v553 = vmul.f32 %v357, 16.0
    %v554 = vmul.f32 %v362, 16.0
    %557 = vrot.lane.b32.xlu0 %v553, 64
    %v558 = vpop.permute.xlu0 %557
    %559 = vrot.lane.b32.xlu0 %v554, 64
    %v560 = vpop.permute.xlu0 %559
    %v564 = vsel %vm227, %v381, 0
    %v567 = vsel %vm227, %v382, 0
    %569 = vmatprep.subr.mxu0 0.0
    %570 = vmatpush1.msra.mxu0 %v535
    %571 = vmatprep.subr.mxu0 0.0
    %572 = vmatpush1.msra.mxu0 %v540
    %573 = vmatprep.subr.mxu0 0.0
    %574 = vmatpush1.msra.mxu0 %v545
    %575 = vmatprep.subr.mxu0 0.0
    %576 = vmatpush1.msra.mxu0 %v550
    %577 = vmatprep.subr.mxu0 0.0
    %578 = vmatpush1.msra.mxu0 0.0
    %579 = vmatprep.subr.mxu0 0.0
    %580 = vmatpush1.msra.mxu0 0.0
    %581 = vmatprep.subr.mxu0 0.0
    %582 = vmatpush1.msra.mxu0 0.0
    %583 = vmatprep.subr.mxu0 0.0
    %584 = vmatpush1.msra.mxu0 0.0
    %585 = vmatprep.subr.mxu0 0.0
    %586 = vmatpush1.msra.mxu0 0.0
    %587 = vmatprep.subr.mxu0 0.0
    %588 = vmatpush1.msra.mxu0 0.0
    %589 = vmatprep.subr.mxu0 0.0
    %590 = vmatpush1.msra.mxu0 0.0
    %591 = vmatprep.subr.mxu0 0.0
    %592 = vmatpush1.msra.mxu0 0.0
    %593 = vmatprep.subr.mxu0 0.0
    %594 = vmatpush1.msra.mxu0 0.0
    %595 = vmatprep.subr.mxu0 0.0
    %596 = vmatpush1.msra.mxu0 0.0
    %597 = vmatprep.subr.mxu0 0.0
    %598 = vmatpush1.msra.mxu0 0.0
    %599 = vmatprep.subr.mxu0 0.0
    %600 = vmatpush1.msra.mxu0 0.0
    %601 = vmatprep.subr.mxu0 0.0
    %602 = vmatpush1.msra.mxu0 0.0
    %603 = vmatprep.subr.mxu0 0.0
    %604 = vmatpush1.msra.mxu0 0.0
    %605 = vmatprep.subr.mxu0 0.0
    %606 = vmatpush1.msra.mxu0 0.0
    %607 = vmatprep.subr.mxu0 0.0
    %608 = vmatpush1.msra.mxu0 0.0
    %609 = vmatprep.subr.mxu0 0.0
    %610 = vmatpush1.msra.mxu0 0.0
    %611 = vmatprep.subr.mxu0 0.0
    %612 = vmatpush1.msra.mxu0 0.0
    %613 = vmatprep.subr.mxu0 0.0
    %614 = vmatpush1.msra.mxu0 0.0
    %615 = vmatprep.subr.mxu0 0.0
    %616 = vmatpush1.msra.mxu0 0.0
    %617 = vmatprep.subr.mxu0 0.0
    %618 = vmatpush1.msra.mxu0 0.0
    %619 = vmatprep.subr.mxu0 0.0
    %620 = vmatpush1.msra.mxu0 0.0
    %621 = vmatprep.subr.mxu0 0.0
    %622 = vmatpush1.msra.mxu0 0.0
    %623 = vmatprep.subr.mxu0 0.0
    %624 = vmatpush1.msra.mxu0 0.0
    %625 = vmatprep.subr.mxu0 0.0
    %626 = vmatpush1.msra.mxu0 0.0
    %627 = vmatprep.subr.mxu0 0.0
    %628 = vmatpush1.msra.mxu0 0.0
    %629 = vmatprep.subr.mxu0 0.0
    %630 = vmatpush1.msra.mxu0 0.0
    %631 = vmatprep.subr.mxu0 0.0
    %632 = vmatpush1.msra.mxu0 0.0
    %633 = vmatprep.mubr.f32.mxu0 0.0
    %634 = vmatmul.mubr.f32.gmra.mrb[0].mxu0 %v564
    %v635 = vpop.f32.mrb[0].mxu0
    %v636 = vadd.f32 %v558, %v635
    %v637 = vpop.f32.mrb[0].mxu0
    %638 = vmatprep.mubr.f32.mxu0 0.0
    %639 = vmatmul.mubr.f32.gmra.mrb[0].mxu0 %v567
    %v640 = vpop.f32.mrb[0].mxu0
    %v641 = vadd.f32 %v560, %v640
    %v642 = vpop.f32.mrb[0].mxu0
    %643 = vdwg.mxu0
    %vm644 = vcmask 523520
    %v645 = vsel %vm644, %v405, 0.0
    %v646 = vsel %vm644, %v406, 0.0
    %v647 = vadd.f32 %v645, %v646
    %v648 = vrot.slane %v647, 4
    %v649 = vadd.f32 %v647, %v648
    %v650 = vrot.slane %v649, 2
    %v651 = vadd.f32 %v649, %v650
    %v652 = vrot.slane %v651, 1
    %v653 = vadd.f32 %v651, %v652
    %655 = vrot.lane.b32.xlu0 %v653, 96
    %v656 = vpop.permute.xlu0 %655
    %v658 = vmul.f32 %v381, %v656
    %v659 = vmul.f32 %v382, %v656
    %v660 = vsel %vm227, %v658, 0.0
    %661 = vadd.xlane.f32.xlu0 %v660
    %v662 = vpop.xlane.xlu0 %661
    %v663 = vsel %vm227, %v659, 0.0
    %664 = vadd.xlane.f32.xlu0 %v663
    %v665 = vpop.xlane.xlu0 %664
    %v666 = vadd.f32 %v662, 16.0
    %v667 = vadd.f32 %v665, 16.0
    %v668 = vrcp.pop %v666
    %v669 = vmul.f32 %v636, %v668
    %v670 = vrcp.pop %v667
    %v671 = vmul.f32 %v641, %v670
    %v672 = vmul.f32 %v669, 0.5
    %v673 = vmul.f32 %v671, 0.5
    %v674 = vmul.f32 %v271, 0.5
    %v675 = vmul.f32 %v272, 0.5
    %v676 = vadd.f32 %v672, %v674
    %v677 = vadd.f32 %v673, %v675
    %v678 = vld [vmem:[#allocation8] sm:$0x1]
    %v679 = vld [vmem:[#allocation10] sm:$0x1]
    %v680 = vsel %vm227, %v676, 0.0
    %681 = vadd.xlane.f32.xlu0 %v680
    %v682 = vpop.xlane.xlu0 %681
    %v683 = vsel %vm227, %v677, 0.0
    %684 = vadd.xlane.f32.xlu0 %v683
    %v685 = vpop.xlane.xlu0 %684
    %v686 = vmul.f32 %v682, %v234
    %v687 = vmul.f32 %v685, %v234
    %v688 = vsub.f32 %v676, %v686
    %v689 = vsub.f32 %v677, %v687
    %v690 = vmul.f32 %v688, %v688
    %v691 = vmul.f32 %v689, %v689
    %v692 = vsel %vm227, %v690, 0.0
    %693 = vadd.xlane.f32.xlu0 %v692
    %v694 = vpop.xlane.xlu0 %693
    %v695 = vsel %vm227, %v691, 0.0
    %696 = vadd.xlane.f32.xlu0 %v695
    %v697 = vpop.xlane.xlu0 %696
    %v698 = vmul.f32 %v694, %v234
    %v699 = vmul.f32 %v697, %v234
    %v700 = vadd.f32 %v698, 1e-05
    %v701 = vadd.f32 %v699, 1e-05
    %v702 = vrsqrt.pop %v700
    %v703 = vrsqrt.pop %v701
    %v704 = vmul.f32 %v688, %v702
    %v705 = vmul.f32 %v689, %v703
    %v707 = vlaneseq
    %v708 = vshrl.u32 %v707, 7
    %v709 = vsub.s32 0, %v708
    %v710 = vrot.slane %v678, %v709
    %v712 = vmul.f32 %v704, %v710
    %v713 = vmul.f32 %v705, %v710
    %v715 = vlaneseq
    %v716 = vshrl.u32 %v715, 7
    %v717 = vsub.s32 0, %v716
    %v718 = vrot.slane %v679, %v717
    %v720 = vadd.f32 %v712, %v718
    %v721 = vadd.f32 %v713, %v718
    %v722 = vmax.f32 %v720, 0.0
    %v723 = vmax.f32 %v721, 0.0
    %v724 = vld [vmem:[%s12] sm:$0x1]
    %v726 = vlaneseq
    %v727 = vshrl.u32 %v726, 7
    %v728 = vsub.s32 0, %v727
    %v729 = vrot.slane %v724, %v728
    %730 = vrot.lane.b32.xlu0 %v729, 32
    %v731 = vpop.permute.xlu0 %730
    %v733 = vmul.f32 %v217, %v731
    %v734 = vmul.f32 %v222, %v731
    %v735 = vld [vmem:[%s13] sm:$0x1]
    %v737 = vlaneseq
    %v738 = vshrl.u32 %v737, 7
    %v739 = vsub.s32 0, %v738
    %v740 = vrot.slane %v735, %v739
    %741 = vrot.lane.b32.xlu0 %v740, 32
    %v742 = vpop.permute.xlu0 %741
    %v744 = vadd.f32 %v733, %v742
    %v745 = vadd.f32 %v734, %v742
    %v746 = vmax.f32 %v744, 0.0
    %v747 = vmax.f32 %v745, 0.0
    %v748 = vlaneseq
    %v749 = vand.u32 %v748, 127
    %v750 = vld [vmem:[%s1] sm:$0xff]
    %v751 = vld [vmem:[%s1 + $0x8] sm:$0xff]
    %v752 = vld [vmem:[%s1 + $0x10] sm:$0xff]
    %v753 = vld [vmem:[%s1 + $0x18] sm:$0xff]
    %v754 = vld [vmem:[%s1 + $0x20] sm:$0xff]
    %v755 = vld [vmem:[%s1 + $0x28] sm:$0xff]
    %756 = vset.pattern.permute.xlu0 0
    %757 = vperm.xlu0 %756, %v750
    %v758 = vpop.permute.xlu0 %757
    %759 = vset.pattern.permute.xlu0 0
    %760 = vperm.xlu0 %759, %v751
    %v761 = vpop.permute.xlu0 %760
    %762 = vset.pattern.permute.xlu0 0
    %763 = vperm.xlu0 %762, %v752
    %v764 = vpop.permute.xlu0 %763
    %765 = vset.pattern.permute.xlu0 0
    %766 = vperm.xlu0 %765, %v753
    %v767 = vpop.permute.xlu0 %766
    %768 = vset.pattern.permute.xlu0 0
    %769 = vperm.xlu0 %768, %v754
    %v770 = vpop.permute.xlu0 %769
    %771 = vset.pattern.permute.xlu0 0
    %772 = vperm.xlu0 %771, %v755
    %v773 = vpop.permute.xlu0 %772
    %vm774 = vcmp.eq.s32.totalorder %v749, %v758
    %vm775 = vcmp.eq.s32.totalorder %v749, %v761
    %vm776 = vcmp.eq.s32.totalorder %v749, %v764
    %vm777 = vcmp.eq.s32.totalorder %v749, %v767
    %vm778 = vcmp.eq.s32.totalorder %v749, %v770
    %vm779 = vcmp.eq.s32.totalorder %v749, %v773
    %v780 = vsel %vm774, 1, 0
    %v781 = vsel %vm775, 1, 0
    %v782 = vsel %vm776, 1, 0
    %v783 = vsel %vm777, 1, 0
    %v784 = vsel %vm778, 1, 0
    %v785 = vsel %vm779, 1, 0
    %v786 = vcvt.s32.f32 %v780
    %v787 = vcvt.s32.f32 %v781
    %v788 = vcvt.s32.f32 %v782
    %v789 = vcvt.s32.f32 %v783
    %v790 = vcvt.s32.f32 %v784
    %v791 = vcvt.s32.f32 %v785
    %v792 = vlaneseq
    %v793 = vshrl.u32 %v792, 7
    %v794 = vadd.s32 %v793, 8
    %v795 = vld [vmem:[%s2] sm:$0x1]
    %v796 = vlaneseq
    %v797 = vshrl.u32 %v796, 7
    %v798 = vsub.s32 0, %v797
    %v799 = vrot.slane %v795, %v798
    %vm800 = vcmp.eq.s32.totalorder %v793, %v799
    %vm801 = vcmp.eq.s32.totalorder %v794, %v799
    %v802 = vsel %vm800, 1, 0
    %v803 = vsel %vm801, 1, 0
    %v804 = vcvt.s32.f32 %v802
    %v805 = vcvt.s32.f32 %v803
    %v806 = vld [vmem:[%s3] sm:$0xff]
    %v807 = vld [vmem:[%s3 + $0x8] sm:$0xff]
    %v808 = vld [vmem:[%s3 + $0x10] sm:$0xff]
    %v809 = vld [vmem:[%s3 + $0x18] sm:$0xff]
    %v810 = vld [vmem:[%s3 + $0x20] sm:$0xff]
    %v811 = vld [vmem:[%s3 + $0x28] sm:$0xff]
    %812 = vset.pattern.permute.xlu0 0
    %813 = vperm.xlu0 %812, %v806
    %v814 = vpop.permute.xlu0 %813
    %815 = vset.pattern.permute.xlu0 0
    %816 = vperm.xlu0 %815, %v807
    %v817 = vpop.permute.xlu0 %816
    %818 = vset.pattern.permute.xlu0 0
    %819 = vperm.xlu0 %818, %v808
    %v820 = vpop.permute.xlu0 %819
    %821 = vset.pattern.permute.xlu0 0
    %822 = vperm.xlu0 %821, %v809
    %v823 = vpop.permute.xlu0 %822
    %824 = vset.pattern.permute.xlu0 0
    %825 = vperm.xlu0 %824, %v810
    %v826 = vpop.permute.xlu0 %825
    %827 = vset.pattern.permute.xlu0 0
    %828 = vperm.xlu0 %827, %v811
    %v829 = vpop.permute.xlu0 %828
    %vm830 = vcmp.eq.s32.totalorder %v749, %v814
    %vm831 = vcmp.eq.s32.totalorder %v749, %v817
    %vm832 = vcmp.eq.s32.totalorder %v749, %v820
    %vm833 = vcmp.eq.s32.totalorder %v749, %v823
    %vm834 = vcmp.eq.s32.totalorder %v749, %v826
    %vm835 = vcmp.eq.s32.totalorder %v749, %v829
    %v836 = vsel %vm830, 1, 0
    %v837 = vsel %vm831, 1, 0
    %v838 = vsel %vm832, 1, 0
    %v839 = vsel %vm833, 1, 0
    %v840 = vsel %vm834, 1, 0
    %v841 = vsel %vm835, 1, 0
    %v842 = vcvt.s32.f32 %v836
    %v843 = vcvt.s32.f32 %v837
    %v844 = vcvt.s32.f32 %v838
    %v845 = vcvt.s32.f32 %v839
    %v846 = vcvt.s32.f32 %v840
    %v847 = vcvt.s32.f32 %v841
    %vm848 = vcmask 392192
    %v850 = vsel %vm848, %v804, 0
    %v853 = vsel %vm848, %v805, 0
    %855 = vmatprep.subr.mxu0 0.0
    %856 = vmatpush1.msra.mxu0 %v842
    %857 = vmatprep.subr.mxu0 0.0
    %858 = vmatpush1.msra.mxu0 %v843
    %859 = vmatprep.subr.mxu0 0.0
    %860 = vmatpush1.msra.mxu0 %v844
    %861 = vmatprep.subr.mxu0 0.0
    %862 = vmatpush1.msra.mxu0 %v845
    %863 = vmatprep.subr.mxu0 0.0
    %864 = vmatpush1.msra.mxu0 %v846
    %865 = vmatprep.subr.mxu0 0.0
    %866 = vmatpush1.msra.mxu0 %v847
    %867 = vmatprep.subr.mxu0 0.0
    %868 = vmatpush1.msra.mxu0 0.0
    %869 = vmatprep.subr.mxu0 0.0
    %870 = vmatpush1.msra.mxu0 0.0
    %871 = vmatprep.subr.mxu0 0.0
    %872 = vmatpush1.msra.mxu0 0.0
    %873 = vmatprep.subr.mxu0 0.0
    %874 = vmatpush1.msra.mxu0 0.0
    %875 = vmatprep.subr.mxu0 0.0
    %876 = vmatpush1.msra.mxu0 0.0
    %877 = vmatprep.subr.mxu0 0.0
    %878 = vmatpush1.msra.mxu0 0.0
    %879 = vmatprep.subr.mxu0 0.0
    %880 = vmatpush1.msra.mxu0 0.0
    %881 = vmatprep.subr.mxu0 0.0
    %882 = vmatpush1.msra.mxu0 0.0
    %883 = vmatprep.subr.mxu0 0.0
    %884 = vmatpush1.msra.mxu0 0.0
    %885 = vmatprep.subr.mxu0 0.0
    %886 = vmatpush1.msra.mxu0 0.0
    %887 = vmatprep.subr.mxu0 0.0
    %888 = vmatpush1.msra.mxu0 0.0
    %889 = vmatprep.subr.mxu0 0.0
    %890 = vmatpush1.msra.mxu0 0.0
    %891 = vmatprep.subr.mxu0 0.0
    %892 = vmatpush1.msra.mxu0 0.0
    %893 = vmatprep.subr.mxu0 0.0
    %894 = vmatpush1.msra.mxu0 0.0
    %895 = vmatprep.subr.mxu0 0.0
    %896 = vmatpush1.msra.mxu0 0.0
    %897 = vmatprep.subr.mxu0 0.0
    %898 = vmatpush1.msra.mxu0 0.0
    %899 = vmatprep.subr.mxu0 0.0
    %900 = vmatpush1.msra.mxu0 0.0
    %901 = vmatprep.subr.mxu0 0.0
    %902 = vmatpush1.msra.mxu0 0.0
    %903 = vmatprep.subr.mxu0 0.0
    %904 = vmatpush1.msra.mxu0 0.0
    %905 = vmatprep.subr.mxu0 0.0
    %906 = vmatpush1.msra.mxu0 0.0
    %907 = vmatprep.subr.mxu0 0.0
    %908 = vmatpush1.msra.mxu0 0.0
    %909 = vmatprep.subr.mxu0 0.0
    %910 = vmatpush1.msra.mxu0 0.0
    %911 = vmatprep.subr.mxu0 0.0
    %912 = vmatpush1.msra.mxu0 0.0
    %913 = vmatprep.subr.mxu0 0.0
    %914 = vmatpush1.msra.mxu0 0.0
    %915 = vmatprep.subr.mxu0 0.0
    %916 = vmatpush1.msra.mxu0 0.0
    %917 = vmatprep.subr.mxu0 0.0
    %918 = vmatpush1.msra.mxu0 0.0
    %919 = vmatprep.mubr.f32.mxu0 0.0
    %920 = vmatmul.mubr.f32.gmra.mrb[0].mxu0 %v850
    %v921 = vpop.f32.mrb[0].mxu0
    %v922 = vadd.f32 1.0, %v921
    %v923 = vpop.f32.mrb[0].mxu0
    %924 = vmatprep.mubr.f32.mxu0 0.0
    %925 = vmatmul.mubr.f32.gmra.mrb[0].mxu0 %v853
    %v926 = vpop.f32.mrb[0].mxu0
    %v927 = vadd.f32 1.0, %v926
    %v928 = vpop.f32.mrb[0].mxu0
    %929 = vdwg.mxu0
    %v930 = vrsqrt.pop %v922
    %v931 = vrsqrt.pop %v927
    %vm932 = vcmp.ge.s32.totalorder %v749, 32
    %v933 = vsel %vm932, 1, 0
    %v934 = vcvt.s32.f32 %v933
    %v935 = vsub.f32 1.0, %v934
    %937 = vset.pattern.permute.xlu0 0
    %938 = vperm.xlu0 %937, %v930
    %v939 = vpop.permute.xlu0 %938
    %942 = vset.pattern.permute.xlu0 0
    %943 = vperm.xlu0 %942, %v931
    %v944 = vpop.permute.xlu0 %943
    %v946 = vmul.f32 %v939, %v935
    %v947 = vmul.f32 %v944, %v935
    %948 = vset.pattern.permute.xlu0 1
    %949 = vperm.xlu0 %948, %v930
    %v950 = vpop.permute.xlu0 %949
    %952 = vset.pattern.permute.xlu0 1
    %953 = vperm.xlu0 %952, %v931
    %v954 = vpop.permute.xlu0 %953
    %v956 = vmul.f32 %v950, %v934
    %v957 = vmul.f32 %v954, %v934
    %v958 = vadd.f32 %v946, %v956
    %v959 = vadd.f32 %v947, %v957
    %v960 = vld [vmem:[%s14] sm:$0xff]
    %v961 = vld [vmem:[%s14 + $0x8] sm:$0xff]
    %v962 = vld [vmem:[%s14 + $0x10] sm:$0xff]
    %v963 = vld [vmem:[%s14 + $0x18] sm:$0xff]
    %966 = vrot.lane.b32.xlu0 %v746, 96
    %v967 = vpop.permute.xlu0 %966
    %968 = vrot.lane.b32.xlu0 %v747, 96
    %v969 = vpop.permute.xlu0 %968
    %v970 = vsel %vm227, %v967, 0
    %v972 = vsel %vm227, %v969, 0
    %974 = vmatprep.subr.mxu0 0.0
    %975 = vmatpush1.msra.mxu0 %v960
    %976 = vmatprep.subr.mxu0 0.0
    %977 = vmatpush1.msra.mxu0 %v961
    %978 = vmatprep.subr.mxu0 0.0
    %979 = vmatpush1.msra.mxu0 %v962
    %980 = vmatprep.subr.mxu0 0.0
    %981 = vmatpush1.msra.mxu0 %v963
    %982 = vmatprep.subr.mxu0 0.0
    %983 = vmatpush1.msra.mxu0 0.0
    %984 = vmatprep.subr.mxu0 0.0
    %985 = vmatpush1.msra.mxu0 0.0
    %986 = vmatprep.subr.mxu0 0.0
    %987 = vmatpush1.msra.mxu0 0.0
    %988 = vmatprep.subr.mxu0 0.0
    %989 = vmatpush1.msra.mxu0 0.0
    %990 = vmatprep.subr.mxu0 0.0
    %991 = vmatpush1.msra.mxu0 0.0
    %992 = vmatprep.subr.mxu0 0.0
    %993 = vmatpush1.msra.mxu0 0.0
    %994 = vmatprep.subr.mxu0 0.0
    %995 = vmatpush1.msra.mxu0 0.0
    %996 = vmatprep.subr.mxu0 0.0
    %997 = vmatpush1.msra.mxu0 0.0
    %998 = vmatprep.subr.mxu0 0.0
    %999 = vmatpush1.msra.mxu0 0.0
    %1000 = vmatprep.subr.mxu0 0.0
    %1001 = vmatpush1.msra.mxu0 0.0
    %1002 = vmatprep.subr.mxu0 0.0
    %1003 = vmatpush1.msra.mxu0 0.0
    %1004 = vmatprep.subr.mxu0 0.0
    %1005 = vmatpush1.msra.mxu0 0.0
    %1006 = vmatprep.subr.mxu0 0.0
    %1007 = vmatpush1.msra.mxu0 0.0
    %1008 = vmatprep.subr.mxu0 0.0
    %1009 = vmatpush1.msra.mxu0 0.0
    %1010 = vmatprep.subr.mxu0 0.0
    %1011 = vmatpush1.msra.mxu0 0.0
    %1012 = vmatprep.subr.mxu0 0.0
    %1013 = vmatpush1.msra.mxu0 0.0
    %1014 = vmatprep.subr.mxu0 0.0
    %1015 = vmatpush1.msra.mxu0 0.0
    %1016 = vmatprep.subr.mxu0 0.0
    %1017 = vmatpush1.msra.mxu0 0.0
    %1018 = vmatprep.subr.mxu0 0.0
    %1019 = vmatpush1.msra.mxu0 0.0
    %1020 = vmatprep.subr.mxu0 0.0
    %1021 = vmatpush1.msra.mxu0 0.0
    %1022 = vmatprep.subr.mxu0 0.0
    %1023 = vmatpush1.msra.mxu0 0.0
    %1024 = vmatprep.subr.mxu0 0.0
    %1025 = vmatpush1.msra.mxu0 0.0
    %1026 = vmatprep.subr.mxu0 0.0
    %1027 = vmatpush1.msra.mxu0 0.0
    %1028 = vmatprep.subr.mxu0 0.0
    %1029 = vmatpush1.msra.mxu0 0.0
    %1030 = vmatprep.subr.mxu0 0.0
    %1031 = vmatpush1.msra.mxu0 0.0
    %1032 = vmatprep.subr.mxu0 0.0
    %1033 = vmatpush1.msra.mxu0 0.0
    %1034 = vmatprep.subr.mxu0 0.0
    %1035 = vmatpush1.msra.mxu0 0.0
    %1036 = vmatprep.subr.mxu0 0.0
    %1037 = vmatpush1.msra.mxu0 0.0
    %1038 = vmatprep.mubr.f32.mxu0 0.0
    %1039 = vmatmul.mubr.f32.gmra.mrb[0].mxu0 %v970
    %v1040 = vpop.f32.mrb[0].mxu0
    %v1041 = vadd.f32 0.0, %v1040
    %v1042 = vpop.f32.mrb[0].mxu0
    %1043 = vmatprep.mubr.f32.mxu0 0.0
    %1044 = vmatmul.mubr.f32.gmra.mrb[0].mxu0 %v972
    %v1045 = vpop.f32.mrb[0].mxu0
    %v1046 = vadd.f32 0.0, %v1045
    %v1047 = vpop.f32.mrb[0].mxu0
    %1048 = vdwg.mxu0
    %v1050 = vsel %vm455, %v786, 0
    %v1053 = vsel %vm455, %v787, 0
    %v1056 = vsel %vm455, %v788, 0
    %v1059 = vsel %vm455, %v789, 0
    %v1062 = vsel %vm455, %v790, 0
    %v1065 = vsel %vm455, %v791, 0
    %1067 = vmatprep.subr.mxu0 0.0
    %1068 = vmatpush1.msra.mxu0 %v1041
    %1069 = vmatprep.subr.mxu0 0.0
    %1070 = vmatpush1.msra.mxu0 %v1046
    %1071 = vmatprep.subr.mxu0 0.0
    %1072 = vmatpush1.msra.mxu0 0.0
    %1073 = vmatprep.subr.mxu0 0.0
    %1074 = vmatpush1.msra.mxu0 0.0
    %1075 = vmatprep.subr.mxu0 0.0
    %1076 = vmatpush1.msra.mxu0 0.0
    %1077 = vmatprep.subr.mxu0 0.0
    %1078 = vmatpush1.msra.mxu0 0.0
    %1079 = vmatprep.subr.mxu0 0.0
    %1080 = vmatpush1.msra.mxu0 0.0
    %1081 = vmatprep.subr.mxu0 0.0
    %1082 = vmatpush1.msra.mxu0 0.0
    %1083 = vmatprep.subr.mxu0 0.0
    %1084 = vmatpush1.msra.mxu0 0.0
    %1085 = vmatprep.subr.mxu0 0.0
    %1086 = vmatpush1.msra.mxu0 0.0
    %1087 = vmatprep.subr.mxu0 0.0
    %1088 = vmatpush1.msra.mxu0 0.0
    %1089 = vmatprep.subr.mxu0 0.0
    %1090 = vmatpush1.msra.mxu0 0.0
    %1091 = vmatprep.subr.mxu0 0.0
    %1092 = vmatpush1.msra.mxu0 0.0
    %1093 = vmatprep.subr.mxu0 0.0
    %1094 = vmatpush1.msra.mxu0 0.0
    %1095 = vmatprep.subr.mxu0 0.0
    %1096 = vmatpush1.msra.mxu0 0.0
    %1097 = vmatprep.subr.mxu0 0.0
    %1098 = vmatpush1.msra.mxu0 0.0
    %1099 = vmatprep.subr.mxu0 0.0
    %1100 = vmatpush1.msra.mxu0 0.0
    %1101 = vmatprep.subr.mxu0 0.0
    %1102 = vmatpush1.msra.mxu0 0.0
    %1103 = vmatprep.subr.mxu0 0.0
    %1104 = vmatpush1.msra.mxu0 0.0
    %1105 = vmatprep.subr.mxu0 0.0
    %1106 = vmatpush1.msra.mxu0 0.0
    %1107 = vmatprep.subr.mxu0 0.0
    %1108 = vmatpush1.msra.mxu0 0.0
    %1109 = vmatprep.subr.mxu0 0.0
    %1110 = vmatpush1.msra.mxu0 0.0
    %1111 = vmatprep.subr.mxu0 0.0
    %1112 = vmatpush1.msra.mxu0 0.0
    %1113 = vmatprep.subr.mxu0 0.0
    %1114 = vmatpush1.msra.mxu0 0.0
    %1115 = vmatprep.subr.mxu0 0.0
    %1116 = vmatpush1.msra.mxu0 0.0
    %1117 = vmatprep.subr.mxu0 0.0
    %1118 = vmatpush1.msra.mxu0 0.0
    %1119 = vmatprep.subr.mxu0 0.0
    %1120 = vmatpush1.msra.mxu0 0.0
    %1121 = vmatprep.subr.mxu0 0.0
    %1122 = vmatpush1.msra.mxu0 0.0
    %1123 = vmatprep.subr.mxu0 0.0
    %1124 = vmatpush1.msra.mxu0 0.0
    %1125 = vmatprep.subr.mxu0 0.0
    %1126 = vmatpush1.msra.mxu0 0.0
    %1127 = vmatprep.subr.mxu0 0.0
    %1128 = vmatpush1.msra.mxu0 0.0
    %1129 = vmatprep.subr.mxu0 0.0
    %1130 = vmatpush1.msra.mxu0 0.0
    %1131 = vmatprep.mubr.f32.mxu0 0.0
    %1132 = vmatmul.mubr.f32.gmra.mrb[0].mxu0 %v1050
    %v1133 = vpop.f32.mrb[0].mxu0
    %v1134 = vadd.f32 0.0, %v1133
    %v1135 = vpop.f32.mrb[0].mxu0
    %1136 = vmatprep.mubr.f32.mxu0 0.0
    %1137 = vmatmul.mubr.f32.gmra.mrb[0].mxu0 %v1053
    %v1138 = vpop.f32.mrb[0].mxu0
    %v1139 = vadd.f32 0.0, %v1138
    %v1140 = vpop.f32.mrb[0].mxu0
    %1141 = vmatprep.mubr.f32.mxu0 0.0
    %1142 = vmatmul.mubr.f32.gmra.mrb[0].mxu0 %v1056
    %v1143 = vpop.f32.mrb[0].mxu0
    %v1144 = vadd.f32 0.0, %v1143
    %v1145 = vpop.f32.mrb[0].mxu0
    %1146 = vmatprep.mubr.f32.mxu0 0.0
    %1147 = vmatmul.mubr.f32.gmra.mrb[0].mxu0 %v1059
    %v1148 = vpop.f32.mrb[0].mxu0
    %v1149 = vadd.f32 0.0, %v1148
    %v1150 = vpop.f32.mrb[0].mxu0
    %1151 = vmatprep.mubr.f32.mxu0 0.0
    %1152 = vmatmul.mubr.f32.gmra.mrb[0].mxu0 %v1062
    %v1153 = vpop.f32.mrb[0].mxu0
    %v1154 = vadd.f32 0.0, %v1153
    %v1155 = vpop.f32.mrb[0].mxu0
    %1156 = vmatprep.mubr.f32.mxu0 0.0
    %1157 = vmatmul.mubr.f32.gmra.mrb[0].mxu0 %v1065
    %v1158 = vpop.f32.mrb[0].mxu0
    %v1159 = vadd.f32 0.0, %v1158
    %v1160 = vpop.f32.mrb[0].mxu0
    %1161 = vdwg.mxu0
    %1162 = vmatprep.subr.mxu0 0.0
    %1163 = vmatpush1.msra.mxu0 %v930
    %1164 = vmatprep.subr.mxu0 0.0
    %1165 = vmatpush1.msra.mxu0 %v931
    %1166 = vmatprep.subr.mxu0 0.0
    %1167 = vmatpush1.msra.mxu0 0.0
    %1168 = vmatprep.subr.mxu0 0.0
    %1169 = vmatpush1.msra.mxu0 0.0
    %1170 = vmatprep.subr.mxu0 0.0
    %1171 = vmatpush1.msra.mxu0 0.0
    %1172 = vmatprep.subr.mxu0 0.0
    %1173 = vmatpush1.msra.mxu0 0.0
    %1174 = vmatprep.subr.mxu0 0.0
    %1175 = vmatpush1.msra.mxu0 0.0
    %1176 = vmatprep.subr.mxu0 0.0
    %1177 = vmatpush1.msra.mxu0 0.0
    %1178 = vmatprep.subr.mxu0 0.0
    %1179 = vmatpush1.msra.mxu0 0.0
    %1180 = vmatprep.subr.mxu0 0.0
    %1181 = vmatpush1.msra.mxu0 0.0
    %1182 = vmatprep.subr.mxu0 0.0
    %1183 = vmatpush1.msra.mxu0 0.0
    %1184 = vmatprep.subr.mxu0 0.0
    %1185 = vmatpush1.msra.mxu0 0.0
    %1186 = vmatprep.subr.mxu0 0.0
    %1187 = vmatpush1.msra.mxu0 0.0
    %1188 = vmatprep.subr.mxu0 0.0
    %1189 = vmatpush1.msra.mxu0 0.0
    %1190 = vmatprep.subr.mxu0 0.0
    %1191 = vmatpush1.msra.mxu0 0.0
    %1192 = vmatprep.subr.mxu0 0.0
    %1193 = vmatpush1.msra.mxu0 0.0
    %1194 = vmatprep.subr.mxu0 0.0
    %1195 = vmatpush1.msra.mxu0 0.0
    %1196 = vmatprep.subr.mxu0 0.0
    %1197 = vmatpush1.msra.mxu0 0.0
    %1198 = vmatprep.subr.mxu0 0.0
    %1199 = vmatpush1.msra.mxu0 0.0
    %1200 = vmatprep.subr.mxu0 0.0
    %1201 = vmatpush1.msra.mxu0 0.0
    %1202 = vmatprep.subr.mxu0 0.0
    %1203 = vmatpush1.msra.mxu0 0.0
    %1204 = vmatprep.subr.mxu0 0.0
    %1205 = vmatpush1.msra.mxu0 0.0
    %1206 = vmatprep.subr.mxu0 0.0
    %1207 = vmatpush1.msra.mxu0 0.0
    %1208 = vmatprep.subr.mxu0 0.0
    %1209 = vmatpush1.msra.mxu0 0.0
    %1210 = vmatprep.subr.mxu0 0.0
    %1211 = vmatpush1.msra.mxu0 0.0
    %1212 = vmatprep.subr.mxu0 0.0
    %1213 = vmatpush1.msra.mxu0 0.0
    %1214 = vmatprep.subr.mxu0 0.0
    %1215 = vmatpush1.msra.mxu0 0.0
    %1216 = vmatprep.subr.mxu0 0.0
    %1217 = vmatpush1.msra.mxu0 0.0
    %1218 = vmatprep.subr.mxu0 0.0
    %1219 = vmatpush1.msra.mxu0 0.0
    %1220 = vmatprep.subr.mxu0 0.0
    %1221 = vmatpush1.msra.mxu0 0.0
    %1222 = vmatprep.subr.mxu0 0.0
    %1223 = vmatpush1.msra.mxu0 0.0
    %1224 = vmatprep.subr.mxu0 0.0
    %1225 = vmatpush1.msra.mxu0 0.0
    %1226 = vmatprep.mubr.f32.mxu0 0.0
    %1227 = vmatmul.mubr.f32.gmra.mrb[0].mxu0 %v1050
    %v1228 = vpop.f32.mrb[0].mxu0
    %v1229 = vadd.f32 0.0, %v1228
    %v1230 = vpop.f32.mrb[0].mxu0
    %1231 = vmatprep.mubr.f32.mxu0 0.0
    %1232 = vmatmul.mubr.f32.gmra.mrb[0].mxu0 %v1053
    %v1233 = vpop.f32.mrb[0].mxu0
    %v1234 = vadd.f32 0.0, %v1233
    %v1235 = vpop.f32.mrb[0].mxu0
    %1236 = vmatprep.mubr.f32.mxu0 0.0
    %1237 = vmatmul.mubr.f32.gmra.mrb[0].mxu0 %v1056
    %v1238 = vpop.f32.mrb[0].mxu0
    %v1239 = vadd.f32 0.0, %v1238
    %v1240 = vpop.f32.mrb[0].mxu0
    %1241 = vmatprep.mubr.f32.mxu0 0.0
    %1242 = vmatmul.mubr.f32.gmra.mrb[0].mxu0 %v1059
    %v1243 = vpop.f32.mrb[0].mxu0
    %v1244 = vadd.f32 0.0, %v1243
    %v1245 = vpop.f32.mrb[0].mxu0
    %1246 = vmatprep.mubr.f32.mxu0 0.0
    %1247 = vmatmul.mubr.f32.gmra.mrb[0].mxu0 %v1062
    %v1248 = vpop.f32.mrb[0].mxu0
    %v1249 = vadd.f32 0.0, %v1248
    %v1250 = vpop.f32.mrb[0].mxu0
    %1251 = vmatprep.mubr.f32.mxu0 0.0
    %1252 = vmatmul.mubr.f32.gmra.mrb[0].mxu0 %v1065
    %v1253 = vpop.f32.mrb[0].mxu0
    %v1254 = vadd.f32 0.0, %v1253
    %v1255 = vpop.f32.mrb[0].mxu0
    %1256 = vdwg.mxu0
    %v1257 = vmul.f32 %v842, %v1229
    %v1258 = vmul.f32 %v843, %v1234
    %v1259 = vmul.f32 %v844, %v1239
    %v1260 = vmul.f32 %v845, %v1244
    %v1261 = vmul.f32 %v846, %v1249
    %v1262 = vmul.f32 %v847, %v1254
    %1264 = vset.pattern.permute.xlu0 0
    %1265 = vperm.xlu0 %1264, %v1257
    %v1266 = vpop.permute.xlu0 %1265
    %1269 = vset.pattern.permute.xlu0 0
    %1270 = vperm.xlu0 %1269, %v1258
    %v1271 = vpop.permute.xlu0 %1270
    %1274 = vset.pattern.permute.xlu0 0
    %1275 = vperm.xlu0 %1274, %v1259
    %v1276 = vpop.permute.xlu0 %1275
    %1279 = vset.pattern.permute.xlu0 0
    %1280 = vperm.xlu0 %1279, %v1260
    %v1281 = vpop.permute.xlu0 %1280
    %1284 = vset.pattern.permute.xlu0 0
    %1285 = vperm.xlu0 %1284, %v1261
    %v1286 = vpop.permute.xlu0 %1285
    %1289 = vset.pattern.permute.xlu0 0
    %1290 = vperm.xlu0 %1289, %v1262
    %v1291 = vpop.permute.xlu0 %1290
    %v1293 = vmul.f32 %v1266, %v935
    %v1294 = vmul.f32 %v1271, %v935
    %v1295 = vmul.f32 %v1276, %v935
    %v1296 = vmul.f32 %v1281, %v935
    %v1297 = vmul.f32 %v1286, %v935
    %v1298 = vmul.f32 %v1291, %v935
    %1299 = vset.pattern.permute.xlu0 1
    %1300 = vperm.xlu0 %1299, %v1257
    %v1301 = vpop.permute.xlu0 %1300
    %1303 = vset.pattern.permute.xlu0 1
    %1304 = vperm.xlu0 %1303, %v1258
    %v1305 = vpop.permute.xlu0 %1304
    %1307 = vset.pattern.permute.xlu0 1
    %1308 = vperm.xlu0 %1307, %v1259
    %v1309 = vpop.permute.xlu0 %1308
    %1311 = vset.pattern.permute.xlu0 1
    %1312 = vperm.xlu0 %1311, %v1260
    %v1313 = vpop.permute.xlu0 %1312
    %1315 = vset.pattern.permute.xlu0 1
    %1316 = vperm.xlu0 %1315, %v1261
    %v1317 = vpop.permute.xlu0 %1316
    %1319 = vset.pattern.permute.xlu0 1
    %1320 = vperm.xlu0 %1319, %v1262
    %v1321 = vpop.permute.xlu0 %1320
    %v1323 = vmul.f32 %v1301, %v934
    %v1324 = vmul.f32 %v1305, %v934
    %v1325 = vmul.f32 %v1309, %v934
    %v1326 = vmul.f32 %v1313, %v934
    %v1327 = vmul.f32 %v1317, %v934
    %v1328 = vmul.f32 %v1321, %v934
    %v1329 = vadd.f32 %v1293, %v1323
    %v1330 = vadd.f32 %v1294, %v1324
    %v1331 = vadd.f32 %v1295, %v1325
    %v1332 = vadd.f32 %v1296, %v1326
    %v1333 = vadd.f32 %v1297, %v1327
    %v1334 = vadd.f32 %v1298, %v1328
    %v1335 = vmul.f32 %v1329, %v1134
    %v1336 = vmul.f32 %v1330, %v1139
    %v1337 = vmul.f32 %v1331, %v1144
    %v1338 = vmul.f32 %v1332, %v1149
    %v1339 = vmul.f32 %v1333, %v1154
    %v1340 = vmul.f32 %v1334, %v1159
    %1341 = vmatprep.subr.mxu0 0.0
    %1342 = vmatpush1.msra.mxu0 %v1335
    %1343 = vmatprep.subr.mxu0 0.0
    %1344 = vmatpush1.msra.mxu0 %v1336
    %1345 = vmatprep.subr.mxu0 0.0
    %1346 = vmatpush1.msra.mxu0 %v1337
    %1347 = vmatprep.subr.mxu0 0.0
    %1348 = vmatpush1.msra.mxu0 %v1338
    %1349 = vmatprep.subr.mxu0 0.0
    %1350 = vmatpush1.msra.mxu0 %v1339
    %1351 = vmatprep.subr.mxu0 0.0
    %1352 = vmatpush1.msra.mxu0 %v1340
    %1353 = vmatprep.subr.mxu0 0.0
    %1354 = vmatpush1.msra.mxu0 0.0
    %1355 = vmatprep.subr.mxu0 0.0
    %1356 = vmatpush1.msra.mxu0 0.0
    %1357 = vmatprep.subr.mxu0 0.0
    %1358 = vmatpush1.msra.mxu0 0.0
    %1359 = vmatprep.subr.mxu0 0.0
    %1360 = vmatpush1.msra.mxu0 0.0
    %1361 = vmatprep.subr.mxu0 0.0
    %1362 = vmatpush1.msra.mxu0 0.0
    %1363 = vmatprep.subr.mxu0 0.0
    %1364 = vmatpush1.msra.mxu0 0.0
    %1365 = vmatprep.subr.mxu0 0.0
    %1366 = vmatpush1.msra.mxu0 0.0
    %1367 = vmatprep.subr.mxu0 0.0
    %1368 = vmatpush1.msra.mxu0 0.0
    %1369 = vmatprep.subr.mxu0 0.0
    %1370 = vmatpush1.msra.mxu0 0.0
    %1371 = vmatprep.subr.mxu0 0.0
    %1372 = vmatpush1.msra.mxu0 0.0
    %1373 = vmatprep.subr.mxu0 0.0
    %1374 = vmatpush1.msra.mxu0 0.0
    %1375 = vmatprep.subr.mxu0 0.0
    %1376 = vmatpush1.msra.mxu0 0.0
    %1377 = vmatprep.subr.mxu0 0.0
    %1378 = vmatpush1.msra.mxu0 0.0
    %1379 = vmatprep.subr.mxu0 0.0
    %1380 = vmatpush1.msra.mxu0 0.0
    %1381 = vmatprep.subr.mxu0 0.0
    %1382 = vmatpush1.msra.mxu0 0.0
    %1383 = vmatprep.subr.mxu0 0.0
    %1384 = vmatpush1.msra.mxu0 0.0
    %1385 = vmatprep.subr.mxu0 0.0
    %1386 = vmatpush1.msra.mxu0 0.0
    %1387 = vmatprep.subr.mxu0 0.0
    %1388 = vmatpush1.msra.mxu0 0.0
    %1389 = vmatprep.subr.mxu0 0.0
    %1390 = vmatpush1.msra.mxu0 0.0
    %1391 = vmatprep.subr.mxu0 0.0
    %1392 = vmatpush1.msra.mxu0 0.0
    %1393 = vmatprep.subr.mxu0 0.0
    %1394 = vmatpush1.msra.mxu0 0.0
    %1395 = vmatprep.subr.mxu0 0.0
    %1396 = vmatpush1.msra.mxu0 0.0
    %1397 = vmatprep.subr.mxu0 0.0
    %1398 = vmatpush1.msra.mxu0 0.0
    %1399 = vmatprep.subr.mxu0 0.0
    %1400 = vmatpush1.msra.mxu0 0.0
    %1401 = vmatprep.subr.mxu0 0.0
    %1402 = vmatpush1.msra.mxu0 0.0
    %1403 = vmatprep.subr.mxu0 0.0
    %1404 = vmatpush1.msra.mxu0 0.0
    %1405 = vmatprep.mubr.f32.mxu0 0.0
    %1406 = vmatmul.mubr.f32.gmra.mrb[0].mxu0 %v850
    %v1407 = vpop.f32.mrb[0].mxu0
    %v1408 = vadd.f32 0.0, %v1407
    %v1409 = vpop.f32.mrb[0].mxu0
    %1410 = vmatprep.mubr.f32.mxu0 0.0
    %1411 = vmatmul.mubr.f32.gmra.mrb[0].mxu0 %v853
    %v1412 = vpop.f32.mrb[0].mxu0
    %v1413 = vadd.f32 0.0, %v1412
    %v1414 = vpop.f32.mrb[0].mxu0
    %1415 = vdwg.mxu0
    %v1416 = vmul.f32 %v958, %v1408
    %v1417 = vmul.f32 %v959, %v1413
    %v1418 = vmul.f32 %v958, %v958
    %v1419 = vmul.f32 %v959, %v959
    %v1420 = vmul.f32 %v1418, %v1041
    %v1421 = vmul.f32 %v1419, %v1046
    %v1422 = vadd.f32 %v1416, %v1420
    %v1423 = vadd.f32 %v1417, %v1421
    %v1424 = vld [vmem:[%s15] sm:$0x1]
    %v1426 = vlaneseq
    %v1427 = vshrl.u32 %v1426, 7
    %v1428 = vsub.s32 0, %v1427
    %v1429 = vrot.slane %v1424, %v1428
    %v1431 = vadd.f32 %v1422, %v1429
    %v1432 = vadd.f32 %v1423, %v1429
    %1435 = vrot.lane.b32.xlu0 %v1431, 96
    %v1436 = vpop.permute.xlu0 %1435
    %1437 = vrot.lane.b32.xlu0 %v1432, 96
    %v1438 = vpop.permute.xlu0 %1437
    %v1441 = vadd.f32 %v1431, %v1436
    %v1442 = vadd.f32 %v1432, %v1438
    %v1443 = vld [vmem:[%s16] sm:$0xff]
    %v1444 = vld [vmem:[%s16 + $0x8] sm:$0xff]
    %v1445 = vld [vmem:[%s16 + $0x10] sm:$0xff]
    %v1446 = vld [vmem:[%s16 + $0x18] sm:$0xff]
    %v1447 = vld [vmem:[%s17] sm:$0x1]
    %v1449 = vlaneseq
    %v1450 = vshrl.u32 %v1449, 7
    %v1451 = vsub.s32 0, %v1450
    %v1452 = vrot.slane %v1447, %v1451
    %v1455 = vsel %vm227, %v1441, 0
    %v1458 = vsel %vm227, %v1442, 0
    %1460 = vmatprep.subr.mxu0 0.0
    %1461 = vmatpush1.msra.mxu0 %v1443
    %1462 = vmatprep.subr.mxu0 0.0
    %1463 = vmatpush1.msra.mxu0 %v1444
    %1464 = vmatprep.subr.mxu0 0.0
    %1465 = vmatpush1.msra.mxu0 %v1445
    %1466 = vmatprep.subr.mxu0 0.0
    %1467 = vmatpush1.msra.mxu0 %v1446
    %1468 = vmatprep.subr.mxu0 0.0
    %1469 = vmatpush1.msra.mxu0 0.0
    %1470 = vmatprep.subr.mxu0 0.0
    %1471 = vmatpush1.msra.mxu0 0.0
    %1472 = vmatprep.subr.mxu0 0.0
    %1473 = vmatpush1.msra.mxu0 0.0
    %1474 = vmatprep.subr.mxu0 0.0
    %1475 = vmatpush1.msra.mxu0 0.0
    %1476 = vmatprep.subr.mxu0 0.0
    %1477 = vmatpush1.msra.mxu0 0.0
    %1478 = vmatprep.subr.mxu0 0.0
    %1479 = vmatpush1.msra.mxu0 0.0
    %1480 = vmatprep.subr.mxu0 0.0
    %1481 = vmatpush1.msra.mxu0 0.0
    %1482 = vmatprep.subr.mxu0 0.0
    %1483 = vmatpush1.msra.mxu0 0.0
    %1484 = vmatprep.subr.mxu0 0.0
    %1485 = vmatpush1.msra.mxu0 0.0
    %1486 = vmatprep.subr.mxu0 0.0
    %1487 = vmatpush1.msra.mxu0 0.0
    %1488 = vmatprep.subr.mxu0 0.0
    %1489 = vmatpush1.msra.mxu0 0.0
    %1490 = vmatprep.subr.mxu0 0.0
    %1491 = vmatpush1.msra.mxu0 0.0
    %1492 = vmatprep.subr.mxu0 0.0
    %1493 = vmatpush1.msra.mxu0 0.0
    %1494 = vmatprep.subr.mxu0 0.0
    %1495 = vmatpush1.msra.mxu0 0.0
    %1496 = vmatprep.subr.mxu0 0.0
    %1497 = vmatpush1.msra.mxu0 0.0
    %1498 = vmatprep.subr.mxu0 0.0
    %1499 = vmatpush1.msra.mxu0 0.0
    %1500 = vmatprep.subr.mxu0 0.0
    %1501 = vmatpush1.msra.mxu0 0.0
    %1502 = vmatprep.subr.mxu0 0.0
    %1503 = vmatpush1.msra.mxu0 0.0
    %1504 = vmatprep.subr.mxu0 0.0
    %1505 = vmatpush1.msra.mxu0 0.0
    %1506 = vmatprep.subr.mxu0 0.0
    %1507 = vmatpush1.msra.mxu0 0.0
    %1508 = vmatprep.subr.mxu0 0.0
    %1509 = vmatpush1.msra.mxu0 0.0
    %1510 = vmatprep.subr.mxu0 0.0
    %1511 = vmatpush1.msra.mxu0 0.0
    %1512 = vmatprep.subr.mxu0 0.0
    %1513 = vmatpush1.msra.mxu0 0.0
    %1514 = vmatprep.subr.mxu0 0.0
    %1515 = vmatpush1.msra.mxu0 0.0
    %1516 = vmatprep.subr.mxu0 0.0
    %1517 = vmatpush1.msra.mxu0 0.0
    %1518 = vmatprep.subr.mxu0 0.0
    %1519 = vmatpush1.msra.mxu0 0.0
    %1520 = vmatprep.subr.mxu0 0.0
    %1521 = vmatpush1.msra.mxu0 0.0
    %1522 = vmatprep.subr.mxu0 0.0
    %1523 = vmatpush1.msra.mxu0 0.0
    %1524 = vmatprep.mubr.f32.mxu0 0.0
    %1525 = vmatmul.mubr.f32.gmra.mrb[0].mxu0 %v1455
    %v1526 = vpop.f32.mrb[0].mxu0
    %v1527 = vadd.f32 %v1452, %v1526
    %v1528 = vpop.f32.mrb[0].mxu0
    %1529 = vmatprep.mubr.f32.mxu0 0.0
    %1530 = vmatmul.mubr.f32.gmra.mrb[0].mxu0 %v1458
    %v1531 = vpop.f32.mrb[0].mxu0
    %v1532 = vadd.f32 %v1452, %v1531
    %v1533 = vpop.f32.mrb[0].mxu0
    %1534 = vdwg.mxu0
    %v1537 = vadd.f32 %v1527, %v967
    %v1538 = vadd.f32 %v1532, %v969
    %v1539 = vld [vmem:[%s18] sm:$0x1]
    %v1541 = vlaneseq
    %v1542 = vshrl.u32 %v1541, 7
    %v1543 = vsub.s32 0, %v1542
    %v1544 = vrot.slane %v1539, %v1543
    %v1546 = vmul.f32 %v1537, %v1544
    %v1547 = vmul.f32 %v1538, %v1544
    %v1548 = vld [vmem:[%s19] sm:$0x1]
    %v1550 = vlaneseq
    %v1551 = vshrl.u32 %v1550, 7
    %v1552 = vsub.s32 0, %v1551
    %v1553 = vrot.slane %v1548, %v1552
    %v1555 = vadd.f32 %v1546, %v1553
    %v1556 = vadd.f32 %v1547, %v1553
    %v1557 = vmax.f32 %v1555, 0.0
    %v1558 = vmax.f32 %v1556, 0.0
    %v1559 = vld [vmem:[%s20] sm:$0xff]
    %v1560 = vld [vmem:[%s20 + $0x8] sm:$0xff]
    %v1561 = vld [vmem:[%s20 + $0x10] sm:$0xff]
    %v1562 = vld [vmem:[%s20 + $0x18] sm:$0xff]
    %v1563 = vld [vmem:[%s21] sm:$0xff]
    %v1564 = vld [vmem:[%s21 + $0x8] sm:$0xff]
    %v1565 = vld [vmem:[%s21 + $0x10] sm:$0xff]
    %v1566 = vld [vmem:[%s21 + $0x18] sm:$0xff]
    %v1568 = vsel %vm227, %v1557, 0
    %v1571 = vsel %vm227, %v1558, 0
    %1573 = vmatprep.subr.mxu0 0.0
    %1574 = vmatpush1.msra.mxu0 %v1563
    %1575 = vmatprep.subr.mxu0 0.0
    %1576 = vmatpush1.msra.mxu0 %v1564
    %1577 = vmatprep.subr.mxu0 0.0
    %1578 = vmatpush1.msra.mxu0 %v1565
    %1579 = vmatprep.subr.mxu0 0.0
    %1580 = vmatpush1.msra.mxu0 %v1566
    %1581 = vmatprep.subr.mxu0 0.0
    %1582 = vmatpush1.msra.mxu0 0.0
    %1583 = vmatprep.subr.mxu0 0.0
    %1584 = vmatpush1.msra.mxu0 0.0
    %1585 = vmatprep.subr.mxu0 0.0
    %1586 = vmatpush1.msra.mxu0 0.0
    %1587 = vmatprep.subr.mxu0 0.0
    %1588 = vmatpush1.msra.mxu0 0.0
    %1589 = vmatprep.subr.mxu0 0.0
    %1590 = vmatpush1.msra.mxu0 0.0
    %1591 = vmatprep.subr.mxu0 0.0
    %1592 = vmatpush1.msra.mxu0 0.0
    %1593 = vmatprep.subr.mxu0 0.0
    %1594 = vmatpush1.msra.mxu0 0.0
    %1595 = vmatprep.subr.mxu0 0.0
    %1596 = vmatpush1.msra.mxu0 0.0
    %1597 = vmatprep.subr.mxu0 0.0
    %1598 = vmatpush1.msra.mxu0 0.0
    %1599 = vmatprep.subr.mxu0 0.0
    %1600 = vmatpush1.msra.mxu0 0.0
    %1601 = vmatprep.subr.mxu0 0.0
    %1602 = vmatpush1.msra.mxu0 0.0
    %1603 = vmatprep.subr.mxu0 0.0
    %1604 = vmatpush1.msra.mxu0 0.0
    %1605 = vmatprep.subr.mxu0 0.0
    %1606 = vmatpush1.msra.mxu0 0.0
    %1607 = vmatprep.subr.mxu0 0.0
    %1608 = vmatpush1.msra.mxu0 0.0
    %1609 = vmatprep.subr.mxu0 0.0
    %1610 = vmatpush1.msra.mxu0 0.0
    %1611 = vmatprep.subr.mxu0 0.0
    %1612 = vmatpush1.msra.mxu0 0.0
    %1613 = vmatprep.subr.mxu0 0.0
    %1614 = vmatpush1.msra.mxu0 0.0
    %1615 = vmatprep.subr.mxu0 0.0
    %1616 = vmatpush1.msra.mxu0 0.0
    %1617 = vmatprep.subr.mxu0 0.0
    %1618 = vmatpush1.msra.mxu0 0.0
    %1619 = vmatprep.subr.mxu0 0.0
    %1620 = vmatpush1.msra.mxu0 0.0
    %1621 = vmatprep.subr.mxu0 0.0
    %1622 = vmatpush1.msra.mxu0 0.0
    %1623 = vmatprep.subr.mxu0 0.0
    %1624 = vmatpush1.msra.mxu0 0.0
    %1625 = vmatprep.subr.mxu0 0.0
    %1626 = vmatpush1.msra.mxu0 0.0
    %1627 = vmatprep.subr.mxu0 0.0
    %1628 = vmatpush1.msra.mxu0 0.0
    %1629 = vmatprep.subr.mxu0 0.0
    %1630 = vmatpush1.msra.mxu0 0.0
    %1631 = vmatprep.subr.mxu0 0.0
    %1632 = vmatpush1.msra.mxu0 0.0
    %1633 = vmatprep.subr.mxu0 0.0
    %1634 = vmatpush1.msra.mxu0 0.0
    %1635 = vmatprep.subr.mxu0 0.0
    %1636 = vmatpush1.msra.mxu0 0.0
    %1637 = vmatprep.mubr.f32.mxu0 0.0
    %1638 = vmatmul.mubr.f32.gmra.mrb[0].mxu0 %v1568
    %v1639 = vpop.f32.mrb[0].mxu0
    %v1640 = vadd.f32 0.0, %v1639
    %v1641 = vpop.f32.mrb[0].mxu0
    %1642 = vmatprep.mubr.f32.mxu0 0.0
    %1643 = vmatmul.mubr.f32.gmra.mrb[0].mxu0 %v1571
    %v1644 = vpop.f32.mrb[0].mxu0
    %v1645 = vadd.f32 0.0, %v1644
    %v1646 = vpop.f32.mrb[0].mxu0
    %1647 = vdwg.mxu0
    %v1649 = vsel %vm227, %v722, 0
    %v1652 = vsel %vm227, %v723, 0
    %1654 = vmatprep.subr.mxu0 0.0
    %1655 = vmatpush1.msra.mxu0 %v1559
    %1656 = vmatprep.subr.mxu0 0.0
    %1657 = vmatpush1.msra.mxu0 %v1560
    %1658 = vmatprep.subr.mxu0 0.0
    %1659 = vmatpush1.msra.mxu0 %v1561
    %1660 = vmatprep.subr.mxu0 0.0
    %1661 = vmatpush1.msra.mxu0 %v1562
    %1662 = vmatprep.subr.mxu0 0.0
    %1663 = vmatpush1.msra.mxu0 0.0
    %1664 = vmatprep.subr.mxu0 0.0
    %1665 = vmatpush1.msra.mxu0 0.0
    %1666 = vmatprep.subr.mxu0 0.0
    %1667 = vmatpush1.msra.mxu0 0.0
    %1668 = vmatprep.subr.mxu0 0.0
    %1669 = vmatpush1.msra.mxu0 0.0
    %1670 = vmatprep.subr.mxu0 0.0
    %1671 = vmatpush1.msra.mxu0 0.0
    %1672 = vmatprep.subr.mxu0 0.0
    %1673 = vmatpush1.msra.mxu0 0.0
    %1674 = vmatprep.subr.mxu0 0.0
    %1675 = vmatpush1.msra.mxu0 0.0
    %1676 = vmatprep.subr.mxu0 0.0
    %1677 = vmatpush1.msra.mxu0 0.0
    %1678 = vmatprep.subr.mxu0 0.0
    %1679 = vmatpush1.msra.mxu0 0.0
    %1680 = vmatprep.subr.mxu0 0.0
    %1681 = vmatpush1.msra.mxu0 0.0
    %1682 = vmatprep.subr.mxu0 0.0
    %1683 = vmatpush1.msra.mxu0 0.0
    %1684 = vmatprep.subr.mxu0 0.0
    %1685 = vmatpush1.msra.mxu0 0.0
    %1686 = vmatprep.subr.mxu0 0.0
    %1687 = vmatpush1.msra.mxu0 0.0
    %1688 = vmatprep.subr.mxu0 0.0
    %1689 = vmatpush1.msra.mxu0 0.0
    %1690 = vmatprep.subr.mxu0 0.0
    %1691 = vmatpush1.msra.mxu0 0.0
    %1692 = vmatprep.subr.mxu0 0.0
    %1693 = vmatpush1.msra.mxu0 0.0
    %1694 = vmatprep.subr.mxu0 0.0
    %1695 = vmatpush1.msra.mxu0 0.0
    %1696 = vmatprep.subr.mxu0 0.0
    %1697 = vmatpush1.msra.mxu0 0.0
    %1698 = vmatprep.subr.mxu0 0.0
    %1699 = vmatpush1.msra.mxu0 0.0
    %1700 = vmatprep.subr.mxu0 0.0
    %1701 = vmatpush1.msra.mxu0 0.0
    %1702 = vmatprep.subr.mxu0 0.0
    %1703 = vmatpush1.msra.mxu0 0.0
    %1704 = vmatprep.subr.mxu0 0.0
    %1705 = vmatpush1.msra.mxu0 0.0
    %1706 = vmatprep.subr.mxu0 0.0
    %1707 = vmatpush1.msra.mxu0 0.0
    %1708 = vmatprep.subr.mxu0 0.0
    %1709 = vmatpush1.msra.mxu0 0.0
    %1710 = vmatprep.subr.mxu0 0.0
    %1711 = vmatpush1.msra.mxu0 0.0
    %1712 = vmatprep.subr.mxu0 0.0
    %1713 = vmatpush1.msra.mxu0 0.0
    %1714 = vmatprep.subr.mxu0 0.0
    %1715 = vmatpush1.msra.mxu0 0.0
    %1716 = vmatprep.subr.mxu0 0.0
    %1717 = vmatpush1.msra.mxu0 0.0
    %1718 = vmatprep.mubr.f32.mxu0 0.0
    %1719 = vmatmul.mubr.f32.gmra.mrb[0].mxu0 %v1649
    %v1720 = vpop.f32.mrb[0].mxu0
    %v1721 = vadd.f32 %v1640, %v1720
    %v1722 = vpop.f32.mrb[0].mxu0
    %1723 = vmatprep.mubr.f32.mxu0 0.0
    %1724 = vmatmul.mubr.f32.gmra.mrb[0].mxu0 %v1652
    %v1725 = vpop.f32.mrb[0].mxu0
    %v1726 = vadd.f32 %v1645, %v1725
    %v1727 = vpop.f32.mrb[0].mxu0
    %1728 = vdwg.mxu0
    %v1729 = vld [vmem:[%s22] sm:$0x1]
    %v1731 = vlaneseq
    %v1732 = vshrl.u32 %v1731, 7
    %v1733 = vsub.s32 0, %v1732
    %v1734 = vrot.slane %v1729, %v1733
    %v1736 = vadd.f32 %v1721, %v1734
    %v1737 = vadd.f32 %v1726, %v1734
    %v1738 = vtanh.pop %v1736
    %v1739 = vtanh.pop %v1737
    %1740 = vst [vmem:[#allocation11] sm:$0xff] %v1738
    %1741 = vst [vmem:[#allocation11 + $0x8] sm:$0xff] %v1739
    // Predicated region
    $region114: #{tpu_custom_call.1} parent=1 // pred_check
      _
    $region115: #{tpu_custom_call.1} parent=1 // pred_check_branch
      %1743 = sbr.rel (0) target = $region117
    $region116: #{tpu_custom_call.1} parent=1 // pred_region
      %s1745 = ssub.s32 256, 256
      %1746 = vsyncadd [#allocation4], %s1745
      %s1747 = sshll.u32 [#allocation11], 4
      %s1748 = int_to_ptr.vmem [resolvable:$true] %s1747
      %1753 = dma.vmem_to_hbm [thread:$0]  %s1748, 256, %s23, [#allocation4], 128, 128, 8
    $region117: #{tpu_custom_call.1} parent=1 // pred_fallthru
      _
    // Predicated region
    $region118: #{tpu_custom_call.1} parent=1 // pred_check
      _
    $region119: #{tpu_custom_call.1} parent=1 // pred_check_branch
      %1755 = sbr.rel (0) target = $region121
    $region120: #{tpu_custom_call.1} parent=1 // pred_region
      %1756 = dma.done [#allocation4], 256
    $region121: #{tpu_custom_call.1} parent=1 // pred_fallthru
      _
    %1757 = vsyncpa [#allocation3], 1
    %1758 = vsyncpa [#allocation6], 1
    %1759 = vsyncpa [#allocation9], 1
    %1760 = vsyncpa [#allocation4], 1

</llo_original>
